<compile_context>
chip_gen: v6e
topology: v6e:2x2x1
jax: 0.10.0
libtpu: 0.0.40
codegen_flags: <defaults>
</compile_context>

<pallas_src>
import jax
import jax.numpy as jnp
from jax.experimental import pallas as pl
from jax.experimental.pallas import tpu as pltpu

EPS = 1e-5
TILE_COUT = 128  # rows of y per grid step (2 steps for Cout=256)


def conv_bn_kernel(w_ref, x_ref, gamma_ref, beta_ref, o_ref):
    """Fused 1x1-conv + BatchNorm for one Cout tile.

    w_ref:     (TILE_COUT, Cin)   conv weight tile
    x_ref:     (Cin, M)           activations (resident across grid steps)
    gamma_ref: (TILE_COUT, 1)
    beta_ref:  (TILE_COUT, 1)
    o_ref:     (TILE_COUT, M)
    """
    # 1x1 conv == matmul. bf16 operands (cast in VMEM), f32 accumulation on MXU.
    y = jnp.dot(
        w_ref[...].astype(jnp.bfloat16),
        x_ref[...].astype(jnp.bfloat16),
        preferred_element_type=jnp.float32,
    )  # (TILE_COUT, M), f32

    # Training-mode BatchNorm: per-channel stats over the M axis (true M, no
    # padding), biased variance, two-pass (centered) formulation in f32.
    inv_m = 1.0 / y.shape[1]
    mean = jnp.sum(y, axis=1, keepdims=True) * inv_m            # (TILE_COUT, 1)
    yc = y - mean
    var = jnp.sum(yc * yc, axis=1, keepdims=True) * inv_m       # (TILE_COUT, 1)
    scale = gamma_ref[...] * jax.lax.rsqrt(var + EPS)           # (TILE_COUT, 1)
    o_ref[...] = (yc * scale + beta_ref[...]).astype(o_ref.dtype)
    # TODO(synk): running_mean/running_var buffer updates (momentum=0.1) are not
    # materialized; they do not affect the training-mode forward output.


@jax.jit
def conv2d_bn(x_nchw, w_oihw, gamma, beta):
    """Conv2d(1280, 256, k=1, bias=False) + BatchNorm2d(256) forward (train mode)."""
    n, cin, h, w = x_nchw.shape
    cout = w_oihw.shape[0]
    m = n * h * w
    # Free-reshape trick (no transpose) only valid for N == 1, which this module uses.
    assert n == 1, "layout fast-path assumes batch size 1"
    assert cout % TILE_COUT == 0

    x2d = x_nchw.reshape(cin, m)          # metadata-only reshape
    w2d = w_oihw.reshape(cout, cin)       # metadata-only reshape
    gamma2d = gamma.reshape(cout, 1)
    beta2d = beta.reshape(cout, 1)

    out2d = pl.pallas_call(
        conv_bn_kernel,
        out_shape=jax.ShapeDtypeStruct((cout, m), x_nchw.dtype),
        grid=(cout // TILE_COUT,),
        in_specs=[
            pl.BlockSpec((TILE_COUT, cin), lambda i: (i, 0)),   # weight tile streams
            pl.BlockSpec((cin, m), lambda i: (0, 0)),           # x stays resident
            pl.BlockSpec((TILE_COUT, 1), lambda i: (i, 0)),     # gamma per tile
            pl.BlockSpec((TILE_COUT, 1), lambda i: (i, 0)),     # beta per tile
        ],
        out_specs=pl.BlockSpec((TILE_COUT, m), lambda i: (i, 0)),
        compiler_params=pltpu.CompilerParams(
            dimension_semantics=("parallel",),                  # both TCs on v7x
        ),
        cost_estimate=pl.CostEstimate(
            flops=2 * cout * cin * m,
            bytes_accessed=(cout * cin + cin * m + cout * m + 2 * cout) * 4,
            transcendentals=cout,                               # rsqrt per channel
        ),
    )(w2d, x2d, gamma2d, beta2d)

    return out2d.reshape(n, cout, h, w)   # metadata-only reshape back to NCHW


def _reference_f32(x_nchw, w_oihw, gamma, beta):
    """PyTorch-faithful pure-JAX reference (f32 conv1x1 + training-mode BN)."""
    n, cin, h, w = x_nchw.shape
    cout = w_oihw.shape[0]
    x2d = jnp.transpose(x_nchw, (0, 2, 3, 1)).reshape(-1, cin)
    y = x2d @ jnp.transpose(w_oihw.reshape(cout, cin))
    mean = jnp.mean(y, axis=0, keepdims=True)
    var = jnp.mean((y - mean) ** 2, axis=0, keepdims=True)
    out = (y - mean) * jax.lax.rsqrt(var + EPS) * gamma[None, :] + beta[None, :]
    return jnp.transpose(out.reshape(n, h, w, cout), (0, 3, 1, 2))


def _reference_bf16_dot(x_nchw, w_oihw, gamma, beta):
    """Reference that mirrors the kernel's math (bf16 operands, f32 accum + BN)."""
    n, cin, h, w = x_nchw.shape
    cout = w_oihw.shape[0]
    m = n * h * w
    x2d = x_nchw.reshape(cin, m).astype(jnp.bfloat16)
    w2d = w_oihw.reshape(cout, cin).astype(jnp.bfloat16)
    y = jnp.dot(w2d, x2d, preferred_element_type=jnp.float32)
    mean = jnp.mean(y, axis=1, keepdims=True)
    yc = y - mean
    var = jnp.mean(yc * yc, axis=1, keepdims=True)
    out = yc * (gamma[:, None] * jax.lax.rsqrt(var + EPS)) + beta[:, None]
    return out.reshape(n, cout, h, w)


if __name__ == "__main__":
    key = jax.random.PRNGKey(0)
    kx, kw, kg, kb = jax.random.split(key, 4)

    N, CIN, H, W = 1, 1280, 14, 14
    COUT = 256

    x = jax.random.normal(kx, (N, CIN, H, W), dtype=jnp.float32)
    # Conv2d(1280, 256, kernel_size=1, bias=False) weight: (256, 1280, 1, 1)
    w = jax.random.normal(kw, (COUT, CIN, 1, 1), dtype=jnp.float32) * 0.02
    # BatchNorm2d(256) affine params (deterministic, non-trivial)
    gamma = 1.0 + 0.1 * jax.random.normal(kg, (COUT,), dtype=jnp.float32)
    beta = 0.1 * jax.random.normal(kb, (COUT,), dtype=jnp.float32)

    out = jax.block_until_ready(conv2d_bn(x, w, gamma, beta))
    assert out.shape == (N, COUT, H, W)

    # (a) Same-math check: JAX reference using bf16 operands + f32 accumulation,
    #     i.e. exactly what the kernel computes -> tight tolerance.
    ref_bf = jax.block_until_ready(_reference_bf16_dot(x, w, gamma, beta))
    assert jnp.allclose(out, ref_bf, atol=1e-3, rtol=1e-3)

    # (b) PyTorch-faithful f32 reference; looser tolerance budgets the bf16
    #     matmul drift (~1e-3 relative in y, amplified ~1.4x by BN's 1/std).
    ref_f32 = jax.block_until_ready(_reference_f32(x, w, gamma, beta))
    assert jnp.allclose(out, ref_f32, atol=1e-2, rtol=1e-2)

    print("KERNEL_OK")
</pallas_src>

<mosaic_0001>
module attributes {stable_mosaic.version = 11 : i64} {
  func.func @conv_bn_kernel(%arg0: i32, %arg1: memref<128x1280xf32, #tpu.memory_space<vmem>>, %arg2: memref<1280x196xf32, #tpu.memory_space<vmem>>, %arg3: memref<128x1xf32, #tpu.memory_space<vmem>>, %arg4: memref<128x1xf32, #tpu.memory_space<vmem>>, %arg5: memref<128x196xf32, #tpu.memory_space<vmem>>) attributes {dimension_semantics = [#tpu.dimension_semantics<parallel>], iteration_bounds = array<i64: 2>, scalar_prefetch = 0 : i64, scratch_operands = 0 : i64, tpu.core_type = #tpu.core_type<tc>, window_params = [{transform_indices = @transform_0, window_bounds = array<i64: 128, 1280>}, {pipeline_mode = #tpu.pipeline_mode<synchronous>, transform_indices = @transform_1, window_bounds = array<i64: 1280, 196>}, {transform_indices = @transform_2, window_bounds = array<i64: 128, 1>}, {transform_indices = @transform_3, window_bounds = array<i64: 128, 1>}, {transform_indices = @transform_4, window_bounds = array<i64: 128, 196>}]} {
    %c0 = arith.constant 0 : index
    %c0_0 = arith.constant 0 : index
    %0 = vector.load %arg1[%c0, %c0_0] : memref<128x1280xf32, #tpu.memory_space<vmem>>, vector<128x1280xf32>
    %1 = arith.truncf %0 : vector<128x1280xf32> to vector<128x1280xbf16>
    %c0_1 = arith.constant 0 : index
    %c0_2 = arith.constant 0 : index
    %2 = vector.load %arg2[%c0_1, %c0_2] : memref<1280x196xf32, #tpu.memory_space<vmem>>, vector<1280x196xf32>
    %3 = arith.truncf %2 : vector<1280x196xf32> to vector<1280x196xbf16>
    %cst = arith.constant dense<0.000000e+00> : vector<128x196xf32>
    %4 = tpu.matmul %1, %3, %cst {dimension_numbers = #tpu.dot_dimension_numbers<[1], [0], [0], [1], [0, 0, 1, 1], [], []>} : vector<128x1280xbf16>, vector<1280x196xbf16>, vector<128x196xf32> -> vector<128x196xf32>
    %cst_3 = arith.constant dense<0.000000e+00> : vector<128xf32>
    %5 = vector.multi_reduction <add>, %4, %cst_3 [1] : vector<128x196xf32> to vector<128xf32>
    %6 = vector.shape_cast %5 : vector<128xf32> to vector<128x1xf32>
    %cst_4 = arith.constant 0.00510204071 : f32
    %7 = vector.broadcast %cst_4 : f32 to vector<128x1xf32>
    %8 = arith.mulf %6, %7 : vector<128x1xf32>
    %9 = vector.broadcast %8 : vector<128x1xf32> to vector<128x196xf32>
    %10 = arith.subf %4, %9 : vector<128x196xf32>
    %11 = arith.mulf %10, %10 : vector<128x196xf32>
    %cst_5 = arith.constant dense<0.000000e+00> : vector<128xf32>
    %12 = vector.multi_reduction <add>, %11, %cst_5 [1] : vector<128x196xf32> to vector<128xf32>
    %13 = vector.shape_cast %12 : vector<128xf32> to vector<128x1xf32>
    %cst_6 = arith.constant 0.00510204071 : f32
    %14 = vector.broadcast %cst_6 : f32 to vector<128x1xf32>
    %15 = arith.mulf %13, %14 : vector<128x1xf32>
    %c0_7 = arith.constant 0 : index
    %c0_8 = arith.constant 0 : index
    %16 = vector.load %arg3[%c0_7, %c0_8] : memref<128x1xf32, #tpu.memory_space<vmem>>, vector<128x1xf32>
    %cst_9 = arith.constant 9.99999974E-6 : f32
    %17 = vector.broadcast %cst_9 : f32 to vector<128x1xf32>
    %18 = arith.addf %15, %17 : vector<128x1xf32>
    %19 = math.rsqrt %18 : vector<128x1xf32>
    %20 = arith.mulf %16, %19 : vector<128x1xf32>
    %21 = vector.broadcast %20 : vector<128x1xf32> to vector<128x196xf32>
    %22 = arith.mulf %10, %21 : vector<128x196xf32>
    %c0_10 = arith.constant 0 : index
    %c0_11 = arith.constant 0 : index
    %23 = vector.load %arg4[%c0_10, %c0_11] : memref<128x1xf32, #tpu.memory_space<vmem>>, vector<128x1xf32>
    %24 = vector.broadcast %23 : vector<128x1xf32> to vector<128x196xf32>
    %25 = arith.addf %22, %24 : vector<128x196xf32>
    %c0_12 = arith.constant 0 : index
    %c0_13 = arith.constant 0 : index
    %26 = vector.load %arg5[%c0_12, %c0_13] : memref<128x196xf32, #tpu.memory_space<vmem>>, vector<128x196xf32>
    tpu.vector_store %arg5[%c0_12, %c0_13], %25 {strides = array<i32>} : memref<128x196xf32, #tpu.memory_space<vmem>>, vector<128x196xf32>,
    return
  }
  func.func @transform_0(%arg0: i32) -> (i32, i32) {
    %c0_i32 = arith.constant 0 : i32
    %c0_i32_0 = arith.constant 0 : i32
    return %arg0, %c0_i32 : i32, i32
  }
  func.func @transform_1(%arg0: i32) -> (i32, i32) {
    %c0_i32 = arith.constant 0 : i32
    %c0_i32_0 = arith.constant 0 : i32
    %c0_i32_1 = arith.constant 0 : i32
    return %c0_i32, %c0_i32_0 : i32, i32
  }
  func.func @transform_2(%arg0: i32) -> (i32, i32) {
    %c0_i32 = arith.constant 0 : i32
    %c0_i32_0 = arith.constant 0 : i32
    return %arg0, %c0_i32 : i32, i32
  }
  func.func @transform_3(%arg0: i32) -> (i32, i32) {
    %c0_i32 = arith.constant 0 : i32
    %c0_i32_0 = arith.constant 0 : i32
    return %arg0, %c0_i32 : i32, i32
  }
  func.func @transform_4(%arg0: i32) -> (i32, i32) {
    %c0_i32 = arith.constant 0 : i32
    %c0_i32_0 = arith.constant 0 : i32
    return %arg0, %c0_i32 : i32, i32
  }
}

</mosaic_0001>

<llo_original>
// kernel: conv2d_bn.1
$region0: #{conv2d_bn.1}
  #allocation0 [shape = 'u32[]', space=smem, size = 0x4, offset = 0x4, fixed_abs, tag = 'smem constant byte address 0x4 - core index']
  #allocation1 [shape = 'u32[144,128]{1,0:T(1,128)}', space=vmem, size = 0x12000, scoped, tag = 'internal scratch']
  %s0 = inlined_call_operand.vmem [shape: f32[256,1280], index: 0, kind: input, shape index: {}]
  %s1 = inlined_call_operand.vmem [shape: f32[1280,196], index: 1, kind: input, shape index: {}]
  %s2 = inlined_call_operand.vmem [shape: f32[256,1], index: 2, kind: input, shape index: {}]
  %s3 = inlined_call_operand.vmem [shape: f32[256,1], index: 3, kind: input, shape index: {}]
  %s4 = inlined_call_operand.vmem [shape: f32[256,196], index: 4, kind: output, shape index: {}]
  %s5 = sld [smem:[#allocation0]]
  $region49: #{conv2d_bn.1} parent=0
    _
  %s7 = ssub.s32 1, %s5
  %s8 = scalar_select 0, %s7, %s5
  loop: start=0, step=1, limit=4
  $region2: #{conv2d_bn.1} parent=0 // loop_pre_header
    _
  $region3: #{conv2d_bn.1} parent=0 // loop_header
    %s10 = sphi 0, %s14
    %p11 = scmp.ge.s32.totalorder %s10, 4
    %s20 = sphi 0, %s22
    %s23 = sphi 0, %s20
    %s24 = sphi 0, %s23
    %s40 = sphi 0, %s24
    %s44 = sphi 0, %s44
    %s46 = sphi 0, %s44
    %s47 = sphi 0, %s46
    %s61 = sphi 0, %s47
    %s67 = sphi 0, %s69
    %s70 = sphi 0, %s67
    %s71 = sphi 0, %s70
    %s87 = sphi 0, %s71
    %s93 = sphi 0, %s95
    %s96 = sphi 0, %s93
    %s97 = sphi 0, %s96
    %s113 = sphi 0, %s97
    %s119 = sphi 0, %s121
    %s122 = sphi 0, %s119
    %s123 = sphi 0, %s122
    %s139 = sphi 0, %s123
  $region4: #{conv2d_bn.1} parent=0 // loop_header_branch
    %13 = sbr.rel (%p11) target = $region8
  $region5: #{conv2d_bn.1} parent=0 // loop_body
    %s15 = ssub.s32 %s10, 1
    %s16 = ssub.s32 %s10, 2
    %s17 = sadd.s32 %s10, 1
    %s18 = ssub.s32 %s10, %s17
    %p19 = scmp.eq.s32.totalorder %s18, 0
    %s21 = sadd.s32 %s20, 1
    %s22 = scalar_select %p19, %s20, %s21
    %p25 = pneg %p19
    %p26 = scmp.eq.s32.totalorder %s10, 1
    %p27 = por %p25, %p26
    %p28 = scmp.ne.s32.totalorder %s20, %s23
    %p29 = scmp.eq.s32.totalorder %s10, 0
    %p30 = por %p28, %p29
    %p31 = scmp.ne.s32.totalorder %s20, %s23
    %p32 = scmp.eq.s32.totalorder %s15, 1
    %p33 = por %p31, %p32
    %p34 = scmp.ne.s32.totalorder %s23, %s24
    %p35 = scmp.eq.s32.totalorder %s15, 0
    %p36 = por %p34, %p35
    %p37 = scmp.ne.s32.totalorder %s23, %s24
    %p38 = scmp.eq.s32.totalorder %s16, 1
    %p39 = por %p37, %p38
    %p41 = scmp.ne.s32.totalorder %s24, %s40
    %p42 = scmp.eq.s32.totalorder %s16, 0
    %p43 = por %p41, %p42
    %s45 = sadd.s32 %s44, 1
    %p48 = scmp.eq.s32.totalorder %s10, 1
    %p49 = scmp.ne.s32.totalorder %s44, %s46
    %p50 = scmp.eq.s32.totalorder %s10, 0
    %p51 = por %p49, %p50
    %p52 = scmp.ne.s32.totalorder %s44, %s46
    %p53 = scmp.eq.s32.totalorder %s15, 1
    %p54 = por %p52, %p53
    %p55 = scmp.ne.s32.totalorder %s46, %s47
    %p56 = scmp.eq.s32.totalorder %s15, 0
    %p57 = por %p55, %p56
    %p58 = scmp.ne.s32.totalorder %s46, %s47
    %p59 = scmp.eq.s32.totalorder %s16, 1
    %p60 = por %p58, %p59
    %p62 = scmp.ne.s32.totalorder %s47, %s61
    %p63 = scmp.eq.s32.totalorder %s16, 0
    %p64 = por %p62, %p63
    %s65 = ssub.s32 %s10, %s17
    %p66 = scmp.eq.s32.totalorder %s65, 0
    %s68 = sadd.s32 %s67, 1
    %s69 = scalar_select %p66, %s67, %s68
    %p72 = pneg %p66
    %p73 = scmp.eq.s32.totalorder %s10, 1
    %p74 = por %p72, %p73
    %p75 = scmp.ne.s32.totalorder %s67, %s70
    %p76 = scmp.eq.s32.totalorder %s10, 0
    %p77 = por %p75, %p76
    %p78 = scmp.ne.s32.totalorder %s67, %s70
    %p79 = scmp.eq.s32.totalorder %s15, 1
    %p80 = por %p78, %p79
    %p81 = scmp.ne.s32.totalorder %s70, %s71
    %p82 = scmp.eq.s32.totalorder %s15, 0
    %p83 = por %p81, %p82
    %p84 = scmp.ne.s32.totalorder %s70, %s71
    %p85 = scmp.eq.s32.totalorder %s16, 1
    %p86 = por %p84, %p85
    %p88 = scmp.ne.s32.totalorder %s71, %s87
    %p89 = scmp.eq.s32.totalorder %s16, 0
    %p90 = por %p88, %p89
    %s91 = ssub.s32 %s10, %s17
    %p92 = scmp.eq.s32.totalorder %s91, 0
    %s94 = sadd.s32 %s93, 1
    %s95 = scalar_select %p92, %s93, %s94
    %p98 = pneg %p92
    %p99 = scmp.eq.s32.totalorder %s10, 1
    %p100 = por %p98, %p99
    %p101 = scmp.ne.s32.totalorder %s93, %s96
    %p102 = scmp.eq.s32.totalorder %s10, 0
    %p103 = por %p101, %p102
    %p104 = scmp.ne.s32.totalorder %s93, %s96
    %p105 = scmp.eq.s32.totalorder %s15, 1
    %p106 = por %p104, %p105
    %p107 = scmp.ne.s32.totalorder %s96, %s97
    %p108 = scmp.eq.s32.totalorder %s15, 0
    %p109 = por %p107, %p108
    %p110 = scmp.ne.s32.totalorder %s96, %s97
    %p111 = scmp.eq.s32.totalorder %s16, 1
    %p112 = por %p110, %p111
    %p114 = scmp.ne.s32.totalorder %s97, %s113
    %p115 = scmp.eq.s32.totalorder %s16, 0
    %p116 = por %p114, %p115
    %s117 = ssub.s32 %s10, %s17
    %p118 = scmp.eq.s32.totalorder %s117, 0
    %s120 = sadd.s32 %s119, 1
    %s121 = scalar_select %p118, %s119, %s120
    %p124 = pneg %p118
    %p125 = scmp.eq.s32.totalorder %s10, 1
    %p126 = por %p124, %p125
    %p127 = scmp.ne.s32.totalorder %s119, %s122
    %p128 = scmp.eq.s32.totalorder %s10, 0
    %p129 = por %p127, %p128
    %p130 = scmp.ne.s32.totalorder %s119, %s122
    %p131 = scmp.eq.s32.totalorder %s15, 1
    %p132 = por %p130, %p131
    %p133 = scmp.ne.s32.totalorder %s122, %s123
    %p134 = scmp.eq.s32.totalorder %s15, 0
    %p135 = por %p133, %p134
    %p136 = scmp.ne.s32.totalorder %s122, %s123
    %p137 = scmp.eq.s32.totalorder %s16, 1
    %p138 = por %p136, %p137
    %p140 = scmp.ne.s32.totalorder %s123, %s139
    %p141 = scmp.eq.s32.totalorder %s16, 0
    %p142 = por %p140, %p141
    %p143 = scmp.le.s32.totalorder 1, %s10
    %p144 = scmp.lt.s32.totalorder %s10, 3
    %p145 = pnand %p143, %p144
    %p146 = pneg %p145
    // Predicated region
    $region9: #{conv2d_bn.1} parent=5 // pred_check
      _
    $region10: #{conv2d_bn.1} parent=5 // pred_check_branch
      %148 = sbr.rel (%p145) target = $region12
    $region11: #{conv2d_bn.1} parent=5 // pred_region
      %s149 = ssub.s32 %s10, 1
      // Predicated region
      $region13: #{conv2d_bn.1} parent=11 // pred_check
        %p150 = pneg %p57
      $region14: #{conv2d_bn.1} parent=11 // pred_check_branch
        %152 = sbr.rel (%p150) target = $region16
      $region15: #{conv2d_bn.1} parent=11 // pred_region
        _
      $region16: #{conv2d_bn.1} parent=11 // pred_fallthru
        _
    $region12: #{conv2d_bn.1} parent=5 // pred_fallthru
      _
    %p153 = scmp.lt.s32.totalorder %s10, 2
    // Predicated region
    $region17: #{conv2d_bn.1} parent=5 // pred_check
      %p154 = pneg %p153
    $region18: #{conv2d_bn.1} parent=5 // pred_check_branch
      %156 = sbr.rel (%p154) target = $region20
    $region19: #{conv2d_bn.1} parent=5 // pred_region
      // Predicated region
      $region21: #{conv2d_bn.1} parent=19 // pred_check
        %p157 = pneg %p30
      $region22: #{conv2d_bn.1} parent=19 // pred_check_branch
        %159 = sbr.rel (%p157) target = $region24
      $region23: #{conv2d_bn.1} parent=19 // pred_region
        %s160 = smul.u32 16, %s10
        %p161 = scmp.lt.s32.totalorder %s160, 31
        %s162 = scalar_select %p161, %s160, 31
        %s163 = smul.addr %s162, 10
        %s164 = smul.addr %s163, 8
        %s165 = scalar_lea.vmem %s0, %s164
        %s166 = smul.u32 16, %s10
      $region24: #{conv2d_bn.1} parent=19 // pred_fallthru
        _
      // Predicated region
      $region25: #{conv2d_bn.1} parent=19 // pred_check
        %p167 = pneg %p77
      $region26: #{conv2d_bn.1} parent=19 // pred_check_branch
        %169 = sbr.rel (%p167) target = $region28
      $region27: #{conv2d_bn.1} parent=19 // pred_region
        %s170 = smul.u32 16, %s10
        %p171 = scmp.lt.s32.totalorder %s170, 31
        %s172 = scalar_select %p171, %s170, 31
        %s173 = smul.addr %s172, 8
        %s174 = scalar_lea.vmem %s2, %s173
        %s175 = smul.u32 16, %s10
      $region28: #{conv2d_bn.1} parent=19 // pred_fallthru
        _
      // Predicated region
      $region29: #{conv2d_bn.1} parent=19 // pred_check
        %p176 = pneg %p103
      $region30: #{conv2d_bn.1} parent=19 // pred_check_branch
        %178 = sbr.rel (%p176) target = $region32
      $region31: #{conv2d_bn.1} parent=19 // pred_region
        %s179 = smul.u32 16, %s10
        %p180 = scmp.lt.s32.totalorder %s179, 31
        %s181 = scalar_select %p180, %s179, 31
        %s182 = smul.addr %s181, 8
        %s183 = scalar_lea.vmem %s3, %s182
        %s184 = smul.u32 16, %s10
      $region32: #{conv2d_bn.1} parent=19 // pred_fallthru
        _
    $region20: #{conv2d_bn.1} parent=5 // pred_fallthru
      _
    %p185 = scmp.le.s32.totalorder 1, %s10
    %p186 = scmp.lt.s32.totalorder %s10, 3
    %p187 = pnand %p185, %p186
    %p188 = pneg %p187
    // Predicated region
    $region33: #{conv2d_bn.1} parent=5 // pred_check
      _
    $region34: #{conv2d_bn.1} parent=5 // pred_check_branch
      %190 = sbr.rel (%p187) target = $region36
    $region35: #{conv2d_bn.1} parent=5 // pred_region
      %s191 = ssub.s32 %s10, 1
      %s192 = smul.u32 16, %s15
      %p193 = scmp.lt.s32.totalorder %s192, 31
      %s194 = scalar_select %p193, %s192, 31
      %s195 = smul.addr %s194, 10
      %s196 = smul.addr %s195, 8
      %s197 = scalar_lea.vmem %s0, %s196
      %p198 = pneg %p36
      %p199 = pneg %p33
      %p200 = pneg %p57
      %p201 = pneg %p54
      %s202 = smul.u32 16, %s15
      %p203 = scmp.lt.s32.totalorder %s202, 31
      %s204 = scalar_select %p203, %s202, 31
      %s205 = smul.addr %s204, 8
      %s206 = scalar_lea.vmem %s2, %s205
      %p207 = pneg %p83
      %p208 = pneg %p80
      %s209 = smul.u32 16, %s15
      %p210 = scmp.lt.s32.totalorder %s209, 31
      %s211 = scalar_select %p210, %s209, 31
      %s212 = smul.addr %s211, 8
      %s213 = scalar_lea.vmem %s3, %s212
      %p214 = pneg %p109
      %p215 = pneg %p106
      %p216 = pneg %p135
      %p217 = pneg %p132
      %s218 = smul.u32 16, %s15
      %p219 = scmp.lt.s32.totalorder %s218, 31
      %s220 = scalar_select %p219, %s218, 31
      %s221 = smul.addr %s220, 2
      %s222 = smul.addr %s221, 8
      %s223 = scalar_lea.vmem %s4, %s222
      %s224 = smul.u32 16, %s15
      %p225 = scmp.lt.s32.totalorder %s224, 31
      %s226 = scalar_select %p225, %s224, 31
      %s227 = smul.addr %s226, 10
      %s228 = smul.addr %s227, 8
      %s229 = scalar_lea.vmem %s0, %s228
      %s230 = smul.u32 16, %s15
      %s231 = smul.u32 16, %s15
      %p232 = scmp.lt.s32.totalorder %s231, 31
      %s233 = scalar_select %p232, %s231, 31
      %s234 = smul.addr %s233, 8
      %s235 = scalar_lea.vmem %s2, %s234
      %s236 = smul.u32 16, %s15
      %s237 = smul.u32 16, %s15
      %p238 = scmp.lt.s32.totalorder %s237, 31
      %s239 = scalar_select %p238, %s237, 31
      %s240 = smul.addr %s239, 8
      %s241 = scalar_lea.vmem %s3, %s240
      %s242 = smul.u32 16, %s15
      %s243 = smul.u32 16, %s15
      %p244 = scmp.lt.s32.totalorder %s243, 31
      %s245 = scalar_select %p244, %s243, 31
      %s246 = smul.addr %s245, 2
      %s247 = smul.addr %s246, 8
      %s248 = scalar_lea.vmem %s4, %s247
      %s249 = smul.u32 16, %s15
      %v250 = vld [vmem:[%s229] sm:$0xff]
      %v251 = vld [vmem:[%s229 + $0x8] sm:$0xff]
      %v252 = vld [vmem:[%s229 + $0x10] sm:$0xff]
      %v253 = vld [vmem:[%s229 + $0x18] sm:$0xff]
      %v254 = vld [vmem:[%s229 + $0x20] sm:$0xff]
      %v255 = vld [vmem:[%s229 + $0x28] sm:$0xff]
      %v256 = vld [vmem:[%s229 + $0x30] sm:$0xff]
      %v257 = vld [vmem:[%s229 + $0x38] sm:$0xff]
      %v258 = vld [vmem:[%s229 + $0x40] sm:$0xff]
      %v259 = vld [vmem:[%s229 + $0x48] sm:$0xff]
      %v260 = vld [vmem:[%s229 + $0x50] sm:$0xff]
      %v261 = vld [vmem:[%s229 + $0x58] sm:$0xff]
      %v262 = vld [vmem:[%s229 + $0x60] sm:$0xff]
      %v263 = vld [vmem:[%s229 + $0x68] sm:$0xff]
      %v264 = vld [vmem:[%s229 + $0x70] sm:$0xff]
      %v265 = vld [vmem:[%s229 + $0x78] sm:$0xff]
      %v266 = vld [vmem:[%s229 + $0x80] sm:$0xff]
      %v267 = vld [vmem:[%s229 + $0x88] sm:$0xff]
      %v268 = vld [vmem:[%s229 + $0x90] sm:$0xff]
      %v269 = vld [vmem:[%s229 + $0x98] sm:$0xff]
      %v270 = vld [vmem:[%s229 + $0xa0] sm:$0xff]
      %v271 = vld [vmem:[%s229 + $0xa8] sm:$0xff]
      %v272 = vld [vmem:[%s229 + $0xb0] sm:$0xff]
      %v273 = vld [vmem:[%s229 + $0xb8] sm:$0xff]
      %v274 = vld [vmem:[%s229 + $0xc0] sm:$0xff]
      %v275 = vld [vmem:[%s229 + $0xc8] sm:$0xff]
      %v276 = vld [vmem:[%s229 + $0xd0] sm:$0xff]
      %v277 = vld [vmem:[%s229 + $0xd8] sm:$0xff]
      %v278 = vld [vmem:[%s229 + $0xe0] sm:$0xff]
      %v279 = vld [vmem:[%s229 + $0xe8] sm:$0xff]
      %v280 = vld [vmem:[%s229 + $0xf0] sm:$0xff]
      %v281 = vld [vmem:[%s229 + $0xf8] sm:$0xff]
      %v282 = vld [vmem:[%s229 + $0x100] sm:$0xff]
      %v283 = vld [vmem:[%s229 + $0x108] sm:$0xff]
      %v284 = vld [vmem:[%s229 + $0x110] sm:$0xff]
      %v285 = vld [vmem:[%s229 + $0x118] sm:$0xff]
      %v286 = vld [vmem:[%s229 + $0x120] sm:$0xff]
      %v287 = vld [vmem:[%s229 + $0x128] sm:$0xff]
      %v288 = vld [vmem:[%s229 + $0x130] sm:$0xff]
      %v289 = vld [vmem:[%s229 + $0x138] sm:$0xff]
      %v290 = vld [vmem:[%s229 + $0x140] sm:$0xff]
      %v291 = vld [vmem:[%s229 + $0x148] sm:$0xff]
      %v292 = vld [vmem:[%s229 + $0x150] sm:$0xff]
      %v293 = vld [vmem:[%s229 + $0x158] sm:$0xff]
      %v294 = vld [vmem:[%s229 + $0x160] sm:$0xff]
      %v295 = vld [vmem:[%s229 + $0x168] sm:$0xff]
      %v296 = vld [vmem:[%s229 + $0x170] sm:$0xff]
      %v297 = vld [vmem:[%s229 + $0x178] sm:$0xff]
      %v298 = vld [vmem:[%s229 + $0x180] sm:$0xff]
      %v299 = vld [vmem:[%s229 + $0x188] sm:$0xff]
      %v300 = vld [vmem:[%s229 + $0x190] sm:$0xff]
      %v301 = vld [vmem:[%s229 + $0x198] sm:$0xff]
      %v302 = vld [vmem:[%s229 + $0x1a0] sm:$0xff]
      %v303 = vld [vmem:[%s229 + $0x1a8] sm:$0xff]
      %v304 = vld [vmem:[%s229 + $0x1b0] sm:$0xff]
      %v305 = vld [vmem:[%s229 + $0x1b8] sm:$0xff]
      %v306 = vld [vmem:[%s229 + $0x1c0] sm:$0xff]
      %v307 = vld [vmem:[%s229 + $0x1c8] sm:$0xff]
      %v308 = vld [vmem:[%s229 + $0x1d0] sm:$0xff]
      %v309 = vld [vmem:[%s229 + $0x1d8] sm:$0xff]
      %v310 = vld [vmem:[%s229 + $0x1e0] sm:$0xff]
      %v311 = vld [vmem:[%s229 + $0x1e8] sm:$0xff]
      %v312 = vld [vmem:[%s229 + $0x1f0] sm:$0xff]
      %v313 = vld [vmem:[%s229 + $0x1f8] sm:$0xff]
      %v314 = vld [vmem:[%s229 + $0x200] sm:$0xff]
      %v315 = vld [vmem:[%s229 + $0x208] sm:$0xff]
      %v316 = vld [vmem:[%s229 + $0x210] sm:$0xff]
      %v317 = vld [vmem:[%s229 + $0x218] sm:$0xff]
      %v318 = vld [vmem:[%s229 + $0x220] sm:$0xff]
      %v319 = vld [vmem:[%s229 + $0x228] sm:$0xff]
      %v320 = vld [vmem:[%s229 + $0x230] sm:$0xff]
      %v321 = vld [vmem:[%s229 + $0x238] sm:$0xff]
      %v322 = vld [vmem:[%s229 + $0x240] sm:$0xff]
      %v323 = vld [vmem:[%s229 + $0x248] sm:$0xff]
      %v324 = vld [vmem:[%s229 + $0x250] sm:$0xff]
      %v325 = vld [vmem:[%s229 + $0x258] sm:$0xff]
      %v326 = vld [vmem:[%s229 + $0x260] sm:$0xff]
      %v327 = vld [vmem:[%s229 + $0x268] sm:$0xff]
      %v328 = vld [vmem:[%s229 + $0x270] sm:$0xff]
      %v329 = vld [vmem:[%s229 + $0x278] sm:$0xff]
      %v330 = vld [vmem:[%s229 + $0x280] sm:$0xff]
      %v331 = vld [vmem:[%s229 + $0x288] sm:$0xff]
      %v332 = vld [vmem:[%s229 + $0x290] sm:$0xff]
      %v333 = vld [vmem:[%s229 + $0x298] sm:$0xff]
      %v334 = vld [vmem:[%s229 + $0x2a0] sm:$0xff]
      %v335 = vld [vmem:[%s229 + $0x2a8] sm:$0xff]
      %v336 = vld [vmem:[%s229 + $0x2b0] sm:$0xff]
      %v337 = vld [vmem:[%s229 + $0x2b8] sm:$0xff]
      %v338 = vld [vmem:[%s229 + $0x2c0] sm:$0xff]
      %v339 = vld [vmem:[%s229 + $0x2c8] sm:$0xff]
      %v340 = vld [vmem:[%s229 + $0x2d0] sm:$0xff]
      %v341 = vld [vmem:[%s229 + $0x2d8] sm:$0xff]
      %v342 = vld [vmem:[%s229 + $0x2e0] sm:$0xff]
      %v343 = vld [vmem:[%s229 + $0x2e8] sm:$0xff]
      %v344 = vld [vmem:[%s229 + $0x2f0] sm:$0xff]
      %v345 = vld [vmem:[%s229 + $0x2f8] sm:$0xff]
      %v346 = vld [vmem:[%s229 + $0x300] sm:$0xff]
      %v347 = vld [vmem:[%s229 + $0x308] sm:$0xff]
      %v348 = vld [vmem:[%s229 + $0x310] sm:$0xff]
      %v349 = vld [vmem:[%s229 + $0x318] sm:$0xff]
      %v350 = vld [vmem:[%s229 + $0x320] sm:$0xff]
      %v351 = vld [vmem:[%s229 + $0x328] sm:$0xff]
      %v352 = vld [vmem:[%s229 + $0x330] sm:$0xff]
      %v353 = vld [vmem:[%s229 + $0x338] sm:$0xff]
      %v354 = vld [vmem:[%s229 + $0x340] sm:$0xff]
      %v355 = vld [vmem:[%s229 + $0x348] sm:$0xff]
      %v356 = vld [vmem:[%s229 + $0x350] sm:$0xff]
      %v357 = vld [vmem:[%s229 + $0x358] sm:$0xff]
      %v358 = vld [vmem:[%s229 + $0x360] sm:$0xff]
      %v359 = vld [vmem:[%s229 + $0x368] sm:$0xff]
      %v360 = vld [vmem:[%s229 + $0x370] sm:$0xff]
      %v361 = vld [vmem:[%s229 + $0x378] sm:$0xff]
      %v362 = vld [vmem:[%s229 + $0x380] sm:$0xff]
      %v363 = vld [vmem:[%s229 + $0x388] sm:$0xff]
      %v364 = vld [vmem:[%s229 + $0x390] sm:$0xff]
      %v365 = vld [vmem:[%s229 + $0x398] sm:$0xff]
      %v366 = vld [vmem:[%s229 + $0x3a0] sm:$0xff]
      %v367 = vld [vmem:[%s229 + $0x3a8] sm:$0xff]
      %v368 = vld [vmem:[%s229 + $0x3b0] sm:$0xff]
      %v369 = vld [vmem:[%s229 + $0x3b8] sm:$0xff]
      %v370 = vld [vmem:[%s229 + $0x3c0] sm:$0xff]
      %v371 = vld [vmem:[%s229 + $0x3c8] sm:$0xff]
      %v372 = vld [vmem:[%s229 + $0x3d0] sm:$0xff]
      %v373 = vld [vmem:[%s229 + $0x3d8] sm:$0xff]
      %v374 = vld [vmem:[%s229 + $0x3e0] sm:$0xff]
      %v375 = vld [vmem:[%s229 + $0x3e8] sm:$0xff]
      %v376 = vld [vmem:[%s229 + $0x3f0] sm:$0xff]
      %v377 = vld [vmem:[%s229 + $0x3f8] sm:$0xff]
      %v378 = vld [vmem:[%s229 + $0x400] sm:$0xff]
      %v379 = vld [vmem:[%s229 + $0x408] sm:$0xff]
      %v380 = vld [vmem:[%s229 + $0x410] sm:$0xff]
      %v381 = vld [vmem:[%s229 + $0x418] sm:$0xff]
      %v382 = vld [vmem:[%s229 + $0x420] sm:$0xff]
      %v383 = vld [vmem:[%s229 + $0x428] sm:$0xff]
      %v384 = vld [vmem:[%s229 + $0x430] sm:$0xff]
      %v385 = vld [vmem:[%s229 + $0x438] sm:$0xff]
      %v386 = vld [vmem:[%s229 + $0x440] sm:$0xff]
      %v387 = vld [vmem:[%s229 + $0x448] sm:$0xff]
      %v388 = vld [vmem:[%s229 + $0x450] sm:$0xff]
      %v389 = vld [vmem:[%s229 + $0x458] sm:$0xff]
      %v390 = vld [vmem:[%s229 + $0x460] sm:$0xff]
      %v391 = vld [vmem:[%s229 + $0x468] sm:$0xff]
      %v392 = vld [vmem:[%s229 + $0x470] sm:$0xff]
      %v393 = vld [vmem:[%s229 + $0x478] sm:$0xff]
      %v394 = vld [vmem:[%s229 + $0x480] sm:$0xff]
      %v395 = vld [vmem:[%s229 + $0x488] sm:$0xff]
      %v396 = vld [vmem:[%s229 + $0x490] sm:$0xff]
      %v397 = vld [vmem:[%s229 + $0x498] sm:$0xff]
      %v398 = vld [vmem:[%s229 + $0x4a0] sm:$0xff]
      %v399 = vld [vmem:[%s229 + $0x4a8] sm:$0xff]
      %v400 = vld [vmem:[%s229 + $0x4b0] sm:$0xff]
      %v401 = vld [vmem:[%s229 + $0x4b8] sm:$0xff]
      %v402 = vld [vmem:[%s229 + $0x4c0] sm:$0xff]
      %v403 = vld [vmem:[%s229 + $0x4c8] sm:$0xff]
      %v404 = vld [vmem:[%s229 + $0x4d0] sm:$0xff]
      %v405 = vld [vmem:[%s229 + $0x4d8] sm:$0xff]
      %v406 = vld [vmem:[%s229 + $0x4e0] sm:$0xff]
      %v407 = vld [vmem:[%s229 + $0x4e8] sm:$0xff]
      %v408 = vld [vmem:[%s229 + $0x4f0] sm:$0xff]
      %v409 = vld [vmem:[%s229 + $0x4f8] sm:$0xff]
      %v410 = vpack.c.bf16 %v260, %v250
      %v411 = vpack.c.bf16 %v261, %v251
      %v412 = vpack.c.bf16 %v262, %v252
      %v413 = vpack.c.bf16 %v263, %v253
      %v414 = vpack.c.bf16 %v264, %v254
      %v415 = vpack.c.bf16 %v265, %v255
      %v416 = vpack.c.bf16 %v266, %v256
      %v417 = vpack.c.bf16 %v267, %v257
      %v418 = vpack.c.bf16 %v268, %v258
      %v419 = vpack.c.bf16 %v269, %v259
      %v420 = vpack.c.bf16 %v280, %v270
      %v421 = vpack.c.bf16 %v281, %v271
      %v422 = vpack.c.bf16 %v282, %v272
      %v423 = vpack.c.bf16 %v283, %v273
      %v424 = vpack.c.bf16 %v284, %v274
      %v425 = vpack.c.bf16 %v285, %v275
      %v426 = vpack.c.bf16 %v286, %v276
      %v427 = vpack.c.bf16 %v287, %v277
      %v428 = vpack.c.bf16 %v288, %v278
      %v429 = vpack.c.bf16 %v289, %v279
      %v430 = vpack.c.bf16 %v300, %v290
      %v431 = vpack.c.bf16 %v301, %v291
      %v432 = vpack.c.bf16 %v302, %v292
      %v433 = vpack.c.bf16 %v303, %v293
      %v434 = vpack.c.bf16 %v304, %v294
      %v435 = vpack.c.bf16 %v305, %v295
      %v436 = vpack.c.bf16 %v306, %v296
      %v437 = vpack.c.bf16 %v307, %v297
      %v438 = vpack.c.bf16 %v308, %v298
      %v439 = vpack.c.bf16 %v309, %v299
      %v440 = vpack.c.bf16 %v320, %v310
      %v441 = vpack.c.bf16 %v321, %v311
      %v442 = vpack.c.bf16 %v322, %v312
      %v443 = vpack.c.bf16 %v323, %v313
      %v444 = vpack.c.bf16 %v324, %v314
      %v445 = vpack.c.bf16 %v325, %v315
      %v446 = vpack.c.bf16 %v326, %v316
      %v447 = vpack.c.bf16 %v327, %v317
      %v448 = vpack.c.bf16 %v328, %v318
      %v449 = vpack.c.bf16 %v329, %v319
      %v450 = vpack.c.bf16 %v340, %v330
      %v451 = vpack.c.bf16 %v341, %v331
      %v452 = vpack.c.bf16 %v342, %v332
      %v453 = vpack.c.bf16 %v343, %v333
      %v454 = vpack.c.bf16 %v344, %v334
      %v455 = vpack.c.bf16 %v345, %v335
      %v456 = vpack.c.bf16 %v346, %v336
      %v457 = vpack.c.bf16 %v347, %v337
      %v458 = vpack.c.bf16 %v348, %v338
      %v459 = vpack.c.bf16 %v349, %v339
      %v460 = vpack.c.bf16 %v360, %v350
      %v461 = vpack.c.bf16 %v361, %v351
      %v462 = vpack.c.bf16 %v362, %v352
      %v463 = vpack.c.bf16 %v363, %v353
      %v464 = vpack.c.bf16 %v364, %v354
      %v465 = vpack.c.bf16 %v365, %v355
      %v466 = vpack.c.bf16 %v366, %v356
      %v467 = vpack.c.bf16 %v367, %v357
      %v468 = vpack.c.bf16 %v368, %v358
      %v469 = vpack.c.bf16 %v369, %v359
      %v470 = vpack.c.bf16 %v380, %v370
      %v471 = vpack.c.bf16 %v381, %v371
      %v472 = vpack.c.bf16 %v382, %v372
      %v473 = vpack.c.bf16 %v383, %v373
      %v474 = vpack.c.bf16 %v384, %v374
      %v475 = vpack.c.bf16 %v385, %v375
      %v476 = vpack.c.bf16 %v386, %v376
      %v477 = vpack.c.bf16 %v387, %v377
      %v478 = vpack.c.bf16 %v388, %v378
      %v479 = vpack.c.bf16 %v389, %v379
      %v480 = vpack.c.bf16 %v400, %v390
      %v481 = vpack.c.bf16 %v401, %v391
      %v482 = vpack.c.bf16 %v402, %v392
      %v483 = vpack.c.bf16 %v403, %v393
      %v484 = vpack.c.bf16 %v404, %v394
      %v485 = vpack.c.bf16 %v405, %v395
      %v486 = vpack.c.bf16 %v406, %v396
      %v487 = vpack.c.bf16 %v407, %v397
      %v488 = vpack.c.bf16 %v408, %v398
      %v489 = vpack.c.bf16 %v409, %v399
      %v490 = vld [vmem:[%s1] sm:$0xff]
      %v491 = vld [vmem:[%s1 + $0x8] sm:$0xff]
      %v492 = vld [vmem:[%s1 + $0x10] sm:$0xff]
      %v493 = vld [vmem:[%s1 + $0x18] sm:$0xff]
      %v494 = vld [vmem:[%s1 + $0x20] sm:$0xff]
      %v495 = vld [vmem:[%s1 + $0x28] sm:$0xff]
      %v496 = vld [vmem:[%s1 + $0x30] sm:$0xff]
      %v497 = vld [vmem:[%s1 + $0x38] sm:$0xff]
      %v498 = vld [vmem:[%s1 + $0x40] sm:$0xff]
      %v499 = vld [vmem:[%s1 + $0x48] sm:$0xff]
      %v500 = vld [vmem:[%s1 + $0x50] sm:$0xff]
      %v501 = vld [vmem:[%s1 + $0x58] sm:$0xff]
      %v502 = vld [vmem:[%s1 + $0x60] sm:$0xff]
      %v503 = vld [vmem:[%s1 + $0x68] sm:$0xff]
      %v504 = vld [vmem:[%s1 + $0x70] sm:$0xff]
      %v505 = vld [vmem:[%s1 + $0x78] sm:$0xff]
      %v506 = vld [vmem:[%s1 + $0x80] sm:$0xff]
      %v507 = vld [vmem:[%s1 + $0x88] sm:$0xff]
      %v508 = vld [vmem:[%s1 + $0x90] sm:$0xff]
      %v509 = vld [vmem:[%s1 + $0x98] sm:$0xff]
      %v510 = vld [vmem:[%s1 + $0xa0] sm:$0xff]
      %v511 = vld [vmem:[%s1 + $0xa8] sm:$0xff]
      %v512 = vld [vmem:[%s1 + $0xb0] sm:$0xff]
      %v513 = vld [vmem:[%s1 + $0xb8] sm:$0xff]
      %v514 = vld [vmem:[%s1 + $0xc0] sm:$0xff]
      %v515 = vld [vmem:[%s1 + $0xc8] sm:$0xff]
      %v516 = vld [vmem:[%s1 + $0xd0] sm:$0xff]
      %v517 = vld [vmem:[%s1 + $0xd8] sm:$0xff]
      %v518 = vld [vmem:[%s1 + $0xe0] sm:$0xff]
      %v519 = vld [vmem:[%s1 + $0xe8] sm:$0xff]
      %v520 = vld [vmem:[%s1 + $0xf0] sm:$0xff]
      %v521 = vld [vmem:[%s1 + $0xf8] sm:$0xff]
      %v522 = vld [vmem:[%s1 + $0x100] sm:$0xff]
      %v523 = vld [vmem:[%s1 + $0x108] sm:$0xff]
      %v524 = vld [vmem:[%s1 + $0x110] sm:$0xff]
      %v525 = vld [vmem:[%s1 + $0x118] sm:$0xff]
      %v526 = vld [vmem:[%s1 + $0x120] sm:$0xff]
      %v527 = vld [vmem:[%s1 + $0x128] sm:$0xff]
      %v528 = vld [vmem:[%s1 + $0x130] sm:$0xff]
      %v529 = vld [vmem:[%s1 + $0x138] sm:$0xff]
      %v530 = vld [vmem:[%s1 + $0x140] sm:$0xff]
      %v531 = vld [vmem:[%s1 + $0x148] sm:$0xff]
      %v532 = vld [vmem:[%s1 + $0x150] sm:$0xff]
      %v533 = vld [vmem:[%s1 + $0x158] sm:$0xff]
      %v534 = vld [vmem:[%s1 + $0x160] sm:$0xff]
      %v535 = vld [vmem:[%s1 + $0x168] sm:$0xff]
      %v536 = vld [vmem:[%s1 + $0x170] sm:$0xff]
      %v537 = vld [vmem:[%s1 + $0x178] sm:$0xff]
      %v538 = vld [vmem:[%s1 + $0x180] sm:$0xff]
      %v539 = vld [vmem:[%s1 + $0x188] sm:$0xff]
      %v540 = vld [vmem:[%s1 + $0x190] sm:$0xff]
      %v541 = vld [vmem:[%s1 + $0x198] sm:$0xff]
      %v542 = vld [vmem:[%s1 + $0x1a0] sm:$0xff]
      %v543 = vld [vmem:[%s1 + $0x1a8] sm:$0xff]
      %v544 = vld [vmem:[%s1 + $0x1b0] sm:$0xff]
      %v545 = vld [vmem:[%s1 + $0x1b8] sm:$0xff]
      %v546 = vld [vmem:[%s1 + $0x1c0] sm:$0xff]
      %v547 = vld [vmem:[%s1 + $0x1c8] sm:$0xff]
      %v548 = vld [vmem:[%s1 + $0x1d0] sm:$0xff]
      %v549 = vld [vmem:[%s1 + $0x1d8] sm:$0xff]
      %v550 = vld [vmem:[%s1 + $0x1e0] sm:$0xff]
      %v551 = vld [vmem:[%s1 + $0x1e8] sm:$0xff]
      %v552 = vld [vmem:[%s1 + $0x1f0] sm:$0xff]
      %v553 = vld [vmem:[%s1 + $0x1f8] sm:$0xff]
      %v554 = vld [vmem:[%s1 + $0x200] sm:$0xff]
      %v555 = vld [vmem:[%s1 + $0x208] sm:$0xff]
      %v556 = vld [vmem:[%s1 + $0x210] sm:$0xff]
      %v557 = vld [vmem:[%s1 + $0x218] sm:$0xff]
      %v558 = vld [vmem:[%s1 + $0x220] sm:$0xff]
      %v559 = vld [vmem:[%s1 + $0x228] sm:$0xff]
      %v560 = vld [vmem:[%s1 + $0x230] sm:$0xff]
      %v561 = vld [vmem:[%s1 + $0x238] sm:$0xff]
      %v562 = vld [vmem:[%s1 + $0x240] sm:$0xff]
      %v563 = vld [vmem:[%s1 + $0x248] sm:$0xff]
      %v564 = vld [vmem:[%s1 + $0x250] sm:$0xff]
      %v565 = vld [vmem:[%s1 + $0x258] sm:$0xff]
      %v566 = vld [vmem:[%s1 + $0x260] sm:$0xff]
      %v567 = vld [vmem:[%s1 + $0x268] sm:$0xff]
      %v568 = vld [vmem:[%s1 + $0x270] sm:$0xff]
      %v569 = vld [vmem:[%s1 + $0x278] sm:$0xff]
      %v570 = vld [vmem:[%s1 + $0x280] sm:$0xff]
      %v571 = vld [vmem:[%s1 + $0x288] sm:$0xff]
      %v572 = vld [vmem:[%s1 + $0x290] sm:$0xff]
      %v573 = vld [vmem:[%s1 + $0x298] sm:$0xff]
      %v574 = vld [vmem:[%s1 + $0x2a0] sm:$0xff]
      %v575 = vld [vmem:[%s1 + $0x2a8] sm:$0xff]
      %v576 = vld [vmem:[%s1 + $0x2b0] sm:$0xff]
      %v577 = vld [vmem:[%s1 + $0x2b8] sm:$0xff]
      %v578 = vld [vmem:[%s1 + $0x2c0] sm:$0xff]
      %v579 = vld [vmem:[%s1 + $0x2c8] sm:$0xff]
      %v580 = vld [vmem:[%s1 + $0x2d0] sm:$0xff]
      %v581 = vld [vmem:[%s1 + $0x2d8] sm:$0xff]
      %v582 = vld [vmem:[%s1 + $0x2e0] sm:$0xff]
      %v583 = vld [vmem:[%s1 + $0x2e8] sm:$0xff]
      %v584 = vld [vmem:[%s1 + $0x2f0] sm:$0xff]
      %v585 = vld [vmem:[%s1 + $0x2f8] sm:$0xff]
      %v586 = vld [vmem:[%s1 + $0x300] sm:$0xff]
      %v587 = vld [vmem:[%s1 + $0x308] sm:$0xff]
      %v588 = vld [vmem:[%s1 + $0x310] sm:$0xff]
      %v589 = vld [vmem:[%s1 + $0x318] sm:$0xff]
      %v590 = vld [vmem:[%s1 + $0x320] sm:$0xff]
      %v591 = vld [vmem:[%s1 + $0x328] sm:$0xff]
      %v592 = vld [vmem:[%s1 + $0x330] sm:$0xff]
      %v593 = vld [vmem:[%s1 + $0x338] sm:$0xff]
      %v594 = vld [vmem:[%s1 + $0x340] sm:$0xff]
      %v595 = vld [vmem:[%s1 + $0x348] sm:$0xff]
      %v596 = vld [vmem:[%s1 + $0x350] sm:$0xff]
      %v597 = vld [vmem:[%s1 + $0x358] sm:$0xff]
      %v598 = vld [vmem:[%s1 + $0x360] sm:$0xff]
      %v599 = vld [vmem:[%s1 + $0x368] sm:$0xff]
      %v600 = vld [vmem:[%s1 + $0x370] sm:$0xff]
      %v601 = vld [vmem:[%s1 + $0x378] sm:$0xff]
      %v602 = vld [vmem:[%s1 + $0x380] sm:$0xff]
      %v603 = vld [vmem:[%s1 + $0x388] sm:$0xff]
      %v604 = vld [vmem:[%s1 + $0x390] sm:$0xff]
      %v605 = vld [vmem:[%s1 + $0x398] sm:$0xff]
      %v606 = vld [vmem:[%s1 + $0x3a0] sm:$0xff]
      %v607 = vld [vmem:[%s1 + $0x3a8] sm:$0xff]
      %v608 = vld [vmem:[%s1 + $0x3b0] sm:$0xff]
      %v609 = vld [vmem:[%s1 + $0x3b8] sm:$0xff]
      %v610 = vld [vmem:[%s1 + $0x3c0] sm:$0xff]
      %v611 = vld [vmem:[%s1 + $0x3c8] sm:$0xff]
      %v612 = vld [vmem:[%s1 + $0x3d0] sm:$0xff]
      %v613 = vld [vmem:[%s1 + $0x3d8] sm:$0xff]
      %v614 = vld [vmem:[%s1 + $0x3e0] sm:$0xff]
      %v615 = vld [vmem:[%s1 + $0x3e8] sm:$0xff]
      %v616 = vld [vmem:[%s1 + $0x3f0] sm:$0xff]
      %v617 = vld [vmem:[%s1 + $0x3f8] sm:$0xff]
      %v618 = vld [vmem:[%s1 + $0x400] sm:$0xff]
      %v619 = vld [vmem:[%s1 + $0x408] sm:$0xff]
      %v620 = vld [vmem:[%s1 + $0x410] sm:$0xff]
      %v621 = vld [vmem:[%s1 + $0x418] sm:$0xff]
      %v622 = vld [vmem:[%s1 + $0x420] sm:$0xff]
      %v623 = vld [vmem:[%s1 + $0x428] sm:$0xff]
      %v624 = vld [vmem:[%s1 + $0x430] sm:$0xff]
      %v625 = vld [vmem:[%s1 + $0x438] sm:$0xff]
      %v626 = vld [vmem:[%s1 + $0x440] sm:$0xff]
      %v627 = vld [vmem:[%s1 + $0x448] sm:$0xff]
      %v628 = vld [vmem:[%s1 + $0x450] sm:$0xff]
      %v629 = vld [vmem:[%s1 + $0x458] sm:$0xff]
      %v630 = vld [vmem:[%s1 + $0x460] sm:$0xff]
      %v631 = vld [vmem:[%s1 + $0x468] sm:$0xff]
      %v632 = vld [vmem:[%s1 + $0x470] sm:$0xff]
      %v633 = vld [vmem:[%s1 + $0x478] sm:$0xff]
      %v634 = vld [vmem:[%s1 + $0x480] sm:$0xff]
      %v635 = vld [vmem:[%s1 + $0x488] sm:$0xff]
      %v636 = vld [vmem:[%s1 + $0x490] sm:$0xff]
      %v637 = vld [vmem:[%s1 + $0x498] sm:$0xff]
      %v638 = vld [vmem:[%s1 + $0x4a0] sm:$0xff]
      %v639 = vld [vmem:[%s1 + $0x4a8] sm:$0xff]
      %v640 = vld [vmem:[%s1 + $0x4b0] sm:$0xff]
      %v641 = vld [vmem:[%s1 + $0x4b8] sm:$0xff]
      %v642 = vld [vmem:[%s1 + $0x4c0] sm:$0xff]
      %v643 = vld [vmem:[%s1 + $0x4c8] sm:$0xff]
      %v644 = vld [vmem:[%s1 + $0x4d0] sm:$0xff]
      %v645 = vld [vmem:[%s1 + $0x4d8] sm:$0xff]
      %v646 = vld [vmem:[%s1 + $0x4e0] sm:$0xff]
      %v647 = vld [vmem:[%s1 + $0x4e8] sm:$0xff]
      %v648 = vld [vmem:[%s1 + $0x4f0] sm:$0xff]
      %v649 = vld [vmem:[%s1 + $0x4f8] sm:$0xff]
      %v650 = vld [vmem:[%s1 + $0x500] sm:$0xff]
      %v651 = vld [vmem:[%s1 + $0x508] sm:$0xff]
      %v652 = vld [vmem:[%s1 + $0x510] sm:$0xff]
      %v653 = vld [vmem:[%s1 + $0x518] sm:$0xff]
      %v654 = vld [vmem:[%s1 + $0x520] sm:$0xff]
      %v655 = vld [vmem:[%s1 + $0x528] sm:$0xff]
      %v656 = vld [vmem:[%s1 + $0x530] sm:$0xff]
      %v657 = vld [vmem:[%s1 + $0x538] sm:$0xff]
      %v658 = vld [vmem:[%s1 + $0x540] sm:$0xff]
      %v659 = vld [vmem:[%s1 + $0x548] sm:$0xff]
      %v660 = vld [vmem:[%s1 + $0x550] sm:$0xff]
      %v661 = vld [vmem:[%s1 + $0x558] sm:$0xff]
      %v662 = vld [vmem:[%s1 + $0x560] sm:$0xff]
      %v663 = vld [vmem:[%s1 + $0x568] sm:$0xff]
      %v664 = vld [vmem:[%s1 + $0x570] sm:$0xff]
      %v665 = vld [vmem:[%s1 + $0x578] sm:$0xff]
      %v666 = vld [vmem:[%s1 + $0x580] sm:$0xff]
      %v667 = vld [vmem:[%s1 + $0x588] sm:$0xff]
      %v668 = vld [vmem:[%s1 + $0x590] sm:$0xff]
      %v669 = vld [vmem:[%s1 + $0x598] sm:$0xff]
      %v670 = vld [vmem:[%s1 + $0x5a0] sm:$0xff]
      %v671 = vld [vmem:[%s1 + $0x5a8] sm:$0xff]
      %v672 = vld [vmem:[%s1 + $0x5b0] sm:$0xff]
      %v673 = vld [vmem:[%s1 + $0x5b8] sm:$0xff]
      %v674 = vld [vmem:[%s1 + $0x5c0] sm:$0xff]
      %v675 = vld [vmem:[%s1 + $0x5c8] sm:$0xff]
      %v676 = vld [vmem:[%s1 + $0x5d0] sm:$0xff]
      %v677 = vld [vmem:[%s1 + $0x5d8] sm:$0xff]
      %v678 = vld [vmem:[%s1 + $0x5e0] sm:$0xff]
      %v679 = vld [vmem:[%s1 + $0x5e8] sm:$0xff]
      %v680 = vld [vmem:[%s1 + $0x5f0] sm:$0xff]
      %v681 = vld [vmem:[%s1 + $0x5f8] sm:$0xff]
      %v682 = vld [vmem:[%s1 + $0x600] sm:$0xff]
      %v683 = vld [vmem:[%s1 + $0x608] sm:$0xff]
      %v684 = vld [vmem:[%s1 + $0x610] sm:$0xff]
      %v685 = vld [vmem:[%s1 + $0x618] sm:$0xff]
      %v686 = vld [vmem:[%s1 + $0x620] sm:$0xff]
      %v687 = vld [vmem:[%s1 + $0x628] sm:$0xff]
      %v688 = vld [vmem:[%s1 + $0x630] sm:$0xff]
      %v689 = vld [vmem:[%s1 + $0x638] sm:$0xff]
      %v690 = vld [vmem:[%s1 + $0x640] sm:$0xff]
      %v691 = vld [vmem:[%s1 + $0x648] sm:$0xff]
      %v692 = vld [vmem:[%s1 + $0x650] sm:$0xff]
      %v693 = vld [vmem:[%s1 + $0x658] sm:$0xff]
      %v694 = vld [vmem:[%s1 + $0x660] sm:$0xff]
      %v695 = vld [vmem:[%s1 + $0x668] sm:$0xff]
      %v696 = vld [vmem:[%s1 + $0x670] sm:$0xff]
      %v697 = vld [vmem:[%s1 + $0x678] sm:$0xff]
      %v698 = vld [vmem:[%s1 + $0x680] sm:$0xff]
      %v699 = vld [vmem:[%s1 + $0x688] sm:$0xff]
      %v700 = vld [vmem:[%s1 + $0x690] sm:$0xff]
      %v701 = vld [vmem:[%s1 + $0x698] sm:$0xff]
      %v702 = vld [vmem:[%s1 + $0x6a0] sm:$0xff]
      %v703 = vld [vmem:[%s1 + $0x6a8] sm:$0xff]
      %v704 = vld [vmem:[%s1 + $0x6b0] sm:$0xff]
      %v705 = vld [vmem:[%s1 + $0x6b8] sm:$0xff]
      %v706 = vld [vmem:[%s1 + $0x6c0] sm:$0xff]
      %v707 = vld [vmem:[%s1 + $0x6c8] sm:$0xff]
      %v708 = vld [vmem:[%s1 + $0x6d0] sm:$0xff]
      %v709 = vld [vmem:[%s1 + $0x6d8] sm:$0xff]
      %v710 = vld [vmem:[%s1 + $0x6e0] sm:$0xff]
      %v711 = vld [vmem:[%s1 + $0x6e8] sm:$0xff]
      %v712 = vld [vmem:[%s1 + $0x6f0] sm:$0xff]
      %v713 = vld [vmem:[%s1 + $0x6f8] sm:$0xff]
      %v714 = vld [vmem:[%s1 + $0x700] sm:$0xff]
      %v715 = vld [vmem:[%s1 + $0x708] sm:$0xff]
      %v716 = vld [vmem:[%s1 + $0x710] sm:$0xff]
      %v717 = vld [vmem:[%s1 + $0x718] sm:$0xff]
      %v718 = vld [vmem:[%s1 + $0x720] sm:$0xff]
      %v719 = vld [vmem:[%s1 + $0x728] sm:$0xff]
      %v720 = vld [vmem:[%s1 + $0x730] sm:$0xff]
      %v721 = vld [vmem:[%s1 + $0x738] sm:$0xff]
      %v722 = vld [vmem:[%s1 + $0x740] sm:$0xff]
      %v723 = vld [vmem:[%s1 + $0x748] sm:$0xff]
      %v724 = vld [vmem:[%s1 + $0x750] sm:$0xff]
      %v725 = vld [vmem:[%s1 + $0x758] sm:$0xff]
      %v726 = vld [vmem:[%s1 + $0x760] sm:$0xff]
      %v727 = vld [vmem:[%s1 + $0x768] sm:$0xff]
      %v728 = vld [vmem:[%s1 + $0x770] sm:$0xff]
      %v729 = vld [vmem:[%s1 + $0x778] sm:$0xff]
      %v730 = vld [vmem:[%s1 + $0x780] sm:$0xff]
      %v731 = vld [vmem:[%s1 + $0x788] sm:$0xff]
      %v732 = vld [vmem:[%s1 + $0x790] sm:$0xff]
      %v733 = vld [vmem:[%s1 + $0x798] sm:$0xff]
      %v734 = vld [vmem:[%s1 + $0x7a0] sm:$0xff]
      %v735 = vld [vmem:[%s1 + $0x7a8] sm:$0xff]
      %v736 = vld [vmem:[%s1 + $0x7b0] sm:$0xff]
      %v737 = vld [vmem:[%s1 + $0x7b8] sm:$0xff]
      %v738 = vld [vmem:[%s1 + $0x7c0] sm:$0xff]
      %v739 = vld [vmem:[%s1 + $0x7c8] sm:$0xff]
      %v740 = vld [vmem:[%s1 + $0x7d0] sm:$0xff]
      %v741 = vld [vmem:[%s1 + $0x7d8] sm:$0xff]
      %v742 = vld [vmem:[%s1 + $0x7e0] sm:$0xff]
      %v743 = vld [vmem:[%s1 + $0x7e8] sm:$0xff]
      %v744 = vld [vmem:[%s1 + $0x7f0] sm:$0xff]
      %v745 = vld [vmem:[%s1 + $0x7f8] sm:$0xff]
      %v746 = vld [vmem:[%s1 + $0x800] sm:$0xff]
      %v747 = vld [vmem:[%s1 + $0x808] sm:$0xff]
      %v748 = vld [vmem:[%s1 + $0x810] sm:$0xff]
      %v749 = vld [vmem:[%s1 + $0x818] sm:$0xff]
      %v750 = vld [vmem:[%s1 + $0x820] sm:$0xff]
      %v751 = vld [vmem:[%s1 + $0x828] sm:$0xff]
      %v752 = vld [vmem:[%s1 + $0x830] sm:$0xff]
      %v753 = vld [vmem:[%s1 + $0x838] sm:$0xff]
      %v754 = vld [vmem:[%s1 + $0x840] sm:$0xff]
      %v755 = vld [vmem:[%s1 + $0x848] sm:$0xff]
      %v756 = vld [vmem:[%s1 + $0x850] sm:$0xff]
      %v757 = vld [vmem:[%s1 + $0x858] sm:$0xff]
      %v758 = vld [vmem:[%s1 + $0x860] sm:$0xff]
      %v759 = vld [vmem:[%s1 + $0x868] sm:$0xff]
      %v760 = vld [vmem:[%s1 + $0x870] sm:$0xff]
      %v761 = vld [vmem:[%s1 + $0x878] sm:$0xff]
      %v762 = vld [vmem:[%s1 + $0x880] sm:$0xff]
      %v763 = vld [vmem:[%s1 + $0x888] sm:$0xff]
      %v764 = vld [vmem:[%s1 + $0x890] sm:$0xff]
      %v765 = vld [vmem:[%s1 + $0x898] sm:$0xff]
      %v766 = vld [vmem:[%s1 + $0x8a0] sm:$0xff]
      %v767 = vld [vmem:[%s1 + $0x8a8] sm:$0xff]
      %v768 = vld [vmem:[%s1 + $0x8b0] sm:$0xff]
      %v769 = vld [vmem:[%s1 + $0x8b8] sm:$0xff]
      %v770 = vld [vmem:[%s1 + $0x8c0] sm:$0xff]
      %v771 = vld [vmem:[%s1 + $0x8c8] sm:$0xff]
      %v772 = vld [vmem:[%s1 + $0x8d0] sm:$0xff]
      %v773 = vld [vmem:[%s1 + $0x8d8] sm:$0xff]
      %v774 = vld [vmem:[%s1 + $0x8e0] sm:$0xff]
      %v775 = vld [vmem:[%s1 + $0x8e8] sm:$0xff]
      %v776 = vld [vmem:[%s1 + $0x8f0] sm:$0xff]
      %v777 = vld [vmem:[%s1 + $0x8f8] sm:$0xff]
      %v778 = vld [vmem:[%s1 + $0x900] sm:$0xff]
      %v779 = vld [vmem:[%s1 + $0x908] sm:$0xff]
      %v780 = vld [vmem:[%s1 + $0x910] sm:$0xff]
      %v781 = vld [vmem:[%s1 + $0x918] sm:$0xff]
      %v782 = vld [vmem:[%s1 + $0x920] sm:$0xff]
      %v783 = vld [vmem:[%s1 + $0x928] sm:$0xff]
      %v784 = vld [vmem:[%s1 + $0x930] sm:$0xff]
      %v785 = vld [vmem:[%s1 + $0x938] sm:$0xff]
      %v786 = vld [vmem:[%s1 + $0x940] sm:$0xff]
      %v787 = vld [vmem:[%s1 + $0x948] sm:$0xff]
      %v788 = vld [vmem:[%s1 + $0x950] sm:$0xff]
      %v789 = vld [vmem:[%s1 + $0x958] sm:$0xff]
      %v790 = vld [vmem:[%s1 + $0x960] sm:$0xff]
      %v791 = vld [vmem:[%s1 + $0x968] sm:$0xff]
      %v792 = vld [vmem:[%s1 + $0x970] sm:$0xff]
      %v793 = vld [vmem:[%s1 + $0x978] sm:$0xff]
      %v794 = vld [vmem:[%s1 + $0x980] sm:$0xff]
      %v795 = vld [vmem:[%s1 + $0x988] sm:$0xff]
      %v796 = vld [vmem:[%s1 + $0x990] sm:$0xff]
      %v797 = vld [vmem:[%s1 + $0x998] sm:$0xff]
      %v798 = vld [vmem:[%s1 + $0x9a0] sm:$0xff]
      %v799 = vld [vmem:[%s1 + $0x9a8] sm:$0xff]
      %v800 = vld [vmem:[%s1 + $0x9b0] sm:$0xff]
      %v801 = vld [vmem:[%s1 + $0x9b8] sm:$0xff]
      %v802 = vld [vmem:[%s1 + $0x9c0] sm:$0xff]
      %v803 = vld [vmem:[%s1 + $0x9c8] sm:$0xff]
      %v804 = vld [vmem:[%s1 + $0x9d0] sm:$0xff]
      %v805 = vld [vmem:[%s1 + $0x9d8] sm:$0xff]
      %v806 = vld [vmem:[%s1 + $0x9e0] sm:$0xff]
      %v807 = vld [vmem:[%s1 + $0x9e8] sm:$0xff]
      %v808 = vld [vmem:[%s1 + $0x9f0] sm:$0xff]
      %v809 = vld [vmem:[%s1 + $0x9f8] sm:$0xff]
      %v810 = vpack.c.bf16 %v492, %v490
      %v811 = vpack.c.bf16 %v493, %v491
      %v812 = vpack.c.bf16 %v496, %v494
      %v813 = vpack.c.bf16 %v497, %v495
      %v814 = vpack.c.bf16 %v500, %v498
      %v815 = vpack.c.bf16 %v501, %v499
      %v816 = vpack.c.bf16 %v504, %v502
      %v817 = vpack.c.bf16 %v505, %v503
      %v818 = vpack.c.bf16 %v508, %v506
      %v819 = vpack.c.bf16 %v509, %v507
      %v820 = vpack.c.bf16 %v512, %v510
      %v821 = vpack.c.bf16 %v513, %v511
      %v822 = vpack.c.bf16 %v516, %v514
      %v823 = vpack.c.bf16 %v517, %v515
      %v824 = vpack.c.bf16 %v520, %v518
      %v825 = vpack.c.bf16 %v521, %v519
      %v826 = vpack.c.bf16 %v524, %v522
      %v827 = vpack.c.bf16 %v525, %v523
      %v828 = vpack.c.bf16 %v528, %v526
      %v829 = vpack.c.bf16 %v529, %v527
      %v830 = vpack.c.bf16 %v532, %v530
      %v831 = vpack.c.bf16 %v533, %v531
      %v832 = vpack.c.bf16 %v536, %v534
      %v833 = vpack.c.bf16 %v537, %v535
      %v834 = vpack.c.bf16 %v540, %v538
      %v835 = vpack.c.bf16 %v541, %v539
      %v836 = vpack.c.bf16 %v544, %v542
      %v837 = vpack.c.bf16 %v545, %v543
      %v838 = vpack.c.bf16 %v548, %v546
      %v839 = vpack.c.bf16 %v549, %v547
      %v840 = vpack.c.bf16 %v552, %v550
      %v841 = vpack.c.bf16 %v553, %v551
      %v842 = vpack.c.bf16 %v556, %v554
      %v843 = vpack.c.bf16 %v557, %v555
      %v844 = vpack.c.bf16 %v560, %v558
      %v845 = vpack.c.bf16 %v561, %v559
      %v846 = vpack.c.bf16 %v564, %v562
      %v847 = vpack.c.bf16 %v565, %v563
      %v848 = vpack.c.bf16 %v568, %v566
      %v849 = vpack.c.bf16 %v569, %v567
      %v850 = vpack.c.bf16 %v572, %v570
      %v851 = vpack.c.bf16 %v573, %v571
      %v852 = vpack.c.bf16 %v576, %v574
      %v853 = vpack.c.bf16 %v577, %v575
      %v854 = vpack.c.bf16 %v580, %v578
      %v855 = vpack.c.bf16 %v581, %v579
      %v856 = vpack.c.bf16 %v584, %v582
      %v857 = vpack.c.bf16 %v585, %v583
      %v858 = vpack.c.bf16 %v588, %v586
      %v859 = vpack.c.bf16 %v589, %v587
      %v860 = vpack.c.bf16 %v592, %v590
      %v861 = vpack.c.bf16 %v593, %v591
      %v862 = vpack.c.bf16 %v596, %v594
      %v863 = vpack.c.bf16 %v597, %v595
      %v864 = vpack.c.bf16 %v600, %v598
      %v865 = vpack.c.bf16 %v601, %v599
      %v866 = vpack.c.bf16 %v604, %v602
      %v867 = vpack.c.bf16 %v605, %v603
      %v868 = vpack.c.bf16 %v608, %v606
      %v869 = vpack.c.bf16 %v609, %v607
      %v870 = vpack.c.bf16 %v612, %v610
      %v871 = vpack.c.bf16 %v613, %v611
      %v872 = vpack.c.bf16 %v616, %v614
      %v873 = vpack.c.bf16 %v617, %v615
      %v874 = vpack.c.bf16 %v620, %v618
      %v875 = vpack.c.bf16 %v621, %v619
      %v876 = vpack.c.bf16 %v624, %v622
      %v877 = vpack.c.bf16 %v625, %v623
      %v878 = vpack.c.bf16 %v628, %v626
      %v879 = vpack.c.bf16 %v629, %v627
      %v880 = vpack.c.bf16 %v632, %v630
      %v881 = vpack.c.bf16 %v633, %v631
      %v882 = vpack.c.bf16 %v636, %v634
      %v883 = vpack.c.bf16 %v637, %v635
      %v884 = vpack.c.bf16 %v640, %v638
      %v885 = vpack.c.bf16 %v641, %v639
      %v886 = vpack.c.bf16 %v644, %v642
      %v887 = vpack.c.bf16 %v645, %v643
      %v888 = vpack.c.bf16 %v648, %v646
      %v889 = vpack.c.bf16 %v649, %v647
      %v890 = vpack.c.bf16 %v652, %v650
      %v891 = vpack.c.bf16 %v653, %v651
      %v892 = vpack.c.bf16 %v656, %v654
      %v893 = vpack.c.bf16 %v657, %v655
      %v894 = vpack.c.bf16 %v660, %v658
      %v895 = vpack.c.bf16 %v661, %v659
      %v896 = vpack.c.bf16 %v664, %v662
      %v897 = vpack.c.bf16 %v665, %v663
      %v898 = vpack.c.bf16 %v668, %v666
      %v899 = vpack.c.bf16 %v669, %v667
      %v900 = vpack.c.bf16 %v672, %v670
      %v901 = vpack.c.bf16 %v673, %v671
      %v902 = vpack.c.bf16 %v676, %v674
      %v903 = vpack.c.bf16 %v677, %v675
      %v904 = vpack.c.bf16 %v680, %v678
      %v905 = vpack.c.bf16 %v681, %v679
      %v906 = vpack.c.bf16 %v684, %v682
      %v907 = vpack.c.bf16 %v685, %v683
      %v908 = vpack.c.bf16 %v688, %v686
      %v909 = vpack.c.bf16 %v689, %v687
      %v910 = vpack.c.bf16 %v692, %v690
      %v911 = vpack.c.bf16 %v693, %v691
      %v912 = vpack.c.bf16 %v696, %v694
      %v913 = vpack.c.bf16 %v697, %v695
      %v914 = vpack.c.bf16 %v700, %v698
      %v915 = vpack.c.bf16 %v701, %v699
      %v916 = vpack.c.bf16 %v704, %v702
      %v917 = vpack.c.bf16 %v705, %v703
      %v918 = vpack.c.bf16 %v708, %v706
      %v919 = vpack.c.bf16 %v709, %v707
      %v920 = vpack.c.bf16 %v712, %v710
      %v921 = vpack.c.bf16 %v713, %v711
      %v922 = vpack.c.bf16 %v716, %v714
      %v923 = vpack.c.bf16 %v717, %v715
      %v924 = vpack.c.bf16 %v720, %v718
      %v925 = vpack.c.bf16 %v721, %v719
      %v926 = vpack.c.bf16 %v724, %v722
      %v927 = vpack.c.bf16 %v725, %v723
      %v928 = vpack.c.bf16 %v728, %v726
      %v929 = vpack.c.bf16 %v729, %v727
      %v930 = vpack.c.bf16 %v732, %v730
      %v931 = vpack.c.bf16 %v733, %v731
      %v932 = vpack.c.bf16 %v736, %v734
      %v933 = vpack.c.bf16 %v737, %v735
      %v934 = vpack.c.bf16 %v740, %v738
      %v935 = vpack.c.bf16 %v741, %v739
      %v936 = vpack.c.bf16 %v744, %v742
      %v937 = vpack.c.bf16 %v745, %v743
      %v938 = vpack.c.bf16 %v748, %v746
      %v939 = vpack.c.bf16 %v749, %v747
      %v940 = vpack.c.bf16 %v752, %v750
      %v941 = vpack.c.bf16 %v753, %v751
      %v942 = vpack.c.bf16 %v756, %v754
      %v943 = vpack.c.bf16 %v757, %v755
      %v944 = vpack.c.bf16 %v760, %v758
      %v945 = vpack.c.bf16 %v761, %v759
      %v946 = vpack.c.bf16 %v764, %v762
      %v947 = vpack.c.bf16 %v765, %v763
      %v948 = vpack.c.bf16 %v768, %v766
      %v949 = vpack.c.bf16 %v769, %v767
      %v950 = vpack.c.bf16 %v772, %v770
      %v951 = vpack.c.bf16 %v773, %v771
      %v952 = vpack.c.bf16 %v776, %v774
      %v953 = vpack.c.bf16 %v777, %v775
      %v954 = vpack.c.bf16 %v780, %v778
      %v955 = vpack.c.bf16 %v781, %v779
      %v956 = vpack.c.bf16 %v784, %v782
      %v957 = vpack.c.bf16 %v785, %v783
      %v958 = vpack.c.bf16 %v788, %v786
      %v959 = vpack.c.bf16 %v789, %v787
      %v960 = vpack.c.bf16 %v792, %v790
      %v961 = vpack.c.bf16 %v793, %v791
      %v962 = vpack.c.bf16 %v796, %v794
      %v963 = vpack.c.bf16 %v797, %v795
      %v964 = vpack.c.bf16 %v800, %v798
      %v965 = vpack.c.bf16 %v801, %v799
      %v966 = vpack.c.bf16 %v804, %v802
      %v967 = vpack.c.bf16 %v805, %v803
      %v968 = vpack.c.bf16 %v808, %v806
      %v969 = vpack.c.bf16 %v809, %v807
      %970 = vmatprep.subr.bf16.mxu0 %v825
      %971 = vmatpush1.bf16.msra.mxu0 %v824
      %972 = vmatprep.subr.bf16.mxu0 %v823
      %973 = vmatpush1.bf16.msra.mxu0 %v822
      %974 = vmatprep.subr.bf16.mxu0 %v821
      %975 = vmatpush1.bf16.msra.mxu0 %v820
      %976 = vmatprep.subr.bf16.mxu0 %v819
      %977 = vmatpush1.bf16.msra.mxu0 %v818
      %978 = vmatprep.subr.bf16.mxu0 %v817
      %979 = vmatpush1.bf16.msra.mxu0 %v816
      %980 = vmatprep.subr.bf16.mxu0 %v815
      %981 = vmatpush1.bf16.msra.mxu0 %v814
      %982 = vmatprep.subr.bf16.mxu0 %v813
      %983 = vmatpush1.bf16.msra.mxu0 %v812
      %984 = vmatprep.subr.bf16.mxu0 %v811
      %985 = vmatpush1.bf16.msra.mxu0 %v810
      %986 = vmatprep.subr.bf16.mxu0 %v841
      %987 = vmatpush2.bf16.msra.mxu0 %v840
      %988 = vmatprep.subr.bf16.mxu0 %v839
      %989 = vmatpush2.bf16.msra.mxu0 %v838
      %990 = vmatprep.subr.bf16.mxu0 %v837
      %991 = vmatpush2.bf16.msra.mxu0 %v836
      %992 = vmatprep.subr.bf16.mxu0 %v835
      %993 = vmatpush2.bf16.msra.mxu0 %v834
      %994 = vmatprep.subr.bf16.mxu0 %v833
      %995 = vmatpush2.bf16.msra.mxu0 %v832
      %996 = vmatprep.subr.bf16.mxu0 %v831
      %997 = vmatpush2.bf16.msra.mxu0 %v830
      %998 = vmatprep.subr.bf16.mxu0 %v829
      %999 = vmatpush2.bf16.msra.mxu0 %v828
      %1000 = vmatprep.subr.bf16.mxu0 %v827
      %1001 = vmatpush2.bf16.msra.mxu0 %v826
      %1002 = vmatprep.mubr.bf16.mxu0 %v411
      %1003 = vmatmul.mubr.bf16.gmra.mxu0 %v410
      %v1004 = vpop.f32.mrf.mxu0
      %v1005 = vadd.f32 0.0, %v1004
      %v1006 = vpop.f32.mrf.mxu0
      %v1007 = vadd.f32 0.0, %v1006
      %v1008 = vpop.f32.mrf.mxu0
      %v1009 = vadd.f32 0.0, %v1008
      %v1010 = vpop.f32.mrf.mxu0
      %v1011 = vadd.f32 0.0, %v1010
      %1012 = vmatprep.mubr.bf16.mxu0 %v421
      %1013 = vmatmul.mubr.bf16.gmra.mxu0 %v420
      %v1014 = vpop.f32.mrf.mxu0
      %v1015 = vadd.f32 0.0, %v1014
      %v1016 = vpop.f32.mrf.mxu0
      %v1017 = vadd.f32 0.0, %v1016
      %v1018 = vpop.f32.mrf.mxu0
      %v1019 = vadd.f32 0.0, %v1018
      %v1020 = vpop.f32.mrf.mxu0
      %v1021 = vadd.f32 0.0, %v1020
      %1022 = vmatprep.mubr.bf16.mxu0 %v431
      %1023 = vmatmul.mubr.bf16.gmra.mxu0 %v430
      %v1024 = vpop.f32.mrf.mxu0
      %v1025 = vadd.f32 0.0, %v1024
      %v1026 = vpop.f32.mrf.mxu0
      %v1027 = vadd.f32 0.0, %v1026
      %v1028 = vpop.f32.mrf.mxu0
      %v1029 = vadd.f32 0.0, %v1028
      %v1030 = vpop.f32.mrf.mxu0
      %v1031 = vadd.f32 0.0, %v1030
      %1032 = vmatprep.mubr.bf16.mxu0 %v441
      %1033 = vmatmul.mubr.bf16.gmra.mxu0 %v440
      %v1034 = vpop.f32.mrf.mxu0
      %v1035 = vadd.f32 0.0, %v1034
      %v1036 = vpop.f32.mrf.mxu0
      %v1037 = vadd.f32 0.0, %v1036
      %v1038 = vpop.f32.mrf.mxu0
      %v1039 = vadd.f32 0.0, %v1038
      %v1040 = vpop.f32.mrf.mxu0
      %v1041 = vadd.f32 0.0, %v1040
      %1042 = vmatprep.mubr.bf16.mxu0 %v451
      %1043 = vmatmul.mubr.bf16.gmra.mxu0 %v450
      %v1044 = vpop.f32.mrf.mxu0
      %v1045 = vadd.f32 0.0, %v1044
      %v1046 = vpop.f32.mrf.mxu0
      %v1047 = vadd.f32 0.0, %v1046
      %v1048 = vpop.f32.mrf.mxu0
      %v1049 = vadd.f32 0.0, %v1048
      %v1050 = vpop.f32.mrf.mxu0
      %v1051 = vadd.f32 0.0, %v1050
      %1052 = vmatprep.mubr.bf16.mxu0 %v461
      %1053 = vmatmul.mubr.bf16.gmra.mxu0 %v460
      %v1054 = vpop.f32.mrf.mxu0
      %v1055 = vadd.f32 0.0, %v1054
      %v1056 = vpop.f32.mrf.mxu0
      %v1057 = vadd.f32 0.0, %v1056
      %v1058 = vpop.f32.mrf.mxu0
      %v1059 = vadd.f32 0.0, %v1058
      %v1060 = vpop.f32.mrf.mxu0
      %v1061 = vadd.f32 0.0, %v1060
      %1062 = vmatprep.mubr.bf16.mxu0 %v471
      %1063 = vmatmul.mubr.bf16.gmra.mxu0 %v470
      %v1064 = vpop.f32.mrf.mxu0
      %v1065 = vadd.f32 0.0, %v1064
      %v1066 = vpop.f32.mrf.mxu0
      %v1067 = vadd.f32 0.0, %v1066
      %v1068 = vpop.f32.mrf.mxu0
      %v1069 = vadd.f32 0.0, %v1068
      %v1070 = vpop.f32.mrf.mxu0
      %v1071 = vadd.f32 0.0, %v1070
      %1072 = vmatprep.mubr.bf16.mxu0 %v481
      %1073 = vmatmul.mubr.bf16.gmra.mxu0 %v480
      %v1074 = vpop.f32.mrf.mxu0
      %v1075 = vadd.f32 0.0, %v1074
      %v1076 = vpop.f32.mrf.mxu0
      %v1077 = vadd.f32 0.0, %v1076
      %v1078 = vpop.f32.mrf.mxu0
      %v1079 = vadd.f32 0.0, %v1078
      %v1080 = vpop.f32.mrf.mxu0
      %v1081 = vadd.f32 0.0, %v1080
      %1082 = vdwg.mxu0
      %1083 = vmatprep.subr.bf16.mxu0 %v857
      %1084 = vmatpush1.bf16.msra.mxu0 %v856
      %1085 = vmatprep.subr.bf16.mxu0 %v855
      %1086 = vmatpush1.bf16.msra.mxu0 %v854
      %1087 = vmatprep.subr.bf16.mxu0 %v853
      %1088 = vmatpush1.bf16.msra.mxu0 %v852
      %1089 = vmatprep.subr.bf16.mxu0 %v851
      %1090 = vmatpush1.bf16.msra.mxu0 %v850
      %1091 = vmatprep.subr.bf16.mxu0 %v849
      %1092 = vmatpush1.bf16.msra.mxu0 %v848
      %1093 = vmatprep.subr.bf16.mxu0 %v847
      %1094 = vmatpush1.bf16.msra.mxu0 %v846
      %1095 = vmatprep.subr.bf16.mxu0 %v845
      %1096 = vmatpush1.bf16.msra.mxu0 %v844
      %1097 = vmatprep.subr.bf16.mxu0 %v843
      %1098 = vmatpush1.bf16.msra.mxu0 %v842
      %1099 = vmatprep.subr.bf16.mxu0 %v873
      %1100 = vmatpush2.bf16.msra.mxu0 %v872
      %1101 = vmatprep.subr.bf16.mxu0 %v871
      %1102 = vmatpush2.bf16.msra.mxu0 %v870
      %1103 = vmatprep.subr.bf16.mxu0 %v869
      %1104 = vmatpush2.bf16.msra.mxu0 %v868
      %1105 = vmatprep.subr.bf16.mxu0 %v867
      %1106 = vmatpush2.bf16.msra.mxu0 %v866
      %1107 = vmatprep.subr.bf16.mxu0 %v865
      %1108 = vmatpush2.bf16.msra.mxu0 %v864
      %1109 = vmatprep.subr.bf16.mxu0 %v863
      %1110 = vmatpush2.bf16.msra.mxu0 %v862
      %1111 = vmatprep.subr.bf16.mxu0 %v861
      %1112 = vmatpush2.bf16.msra.mxu0 %v860
      %1113 = vmatprep.subr.bf16.mxu0 %v859
      %1114 = vmatpush2.bf16.msra.mxu0 %v858
      %1115 = vmatprep.mubr.bf16.mxu0 %v413
      %1116 = vmatmul.mubr.bf16.gmra.mxu0 %v412
      %v1117 = vpop.f32.mrf.mxu0
      %v1118 = vadd.f32 %v1005, %v1117
      %v1119 = vpop.f32.mrf.mxu0
      %v1120 = vadd.f32 %v1007, %v1119
      %v1121 = vpop.f32.mrf.mxu0
      %v1122 = vadd.f32 %v1009, %v1121
      %v1123 = vpop.f32.mrf.mxu0
      %v1124 = vadd.f32 %v1011, %v1123
      %1125 = vmatprep.mubr.bf16.mxu0 %v423
      %1126 = vmatmul.mubr.bf16.gmra.mxu0 %v422
      %v1127 = vpop.f32.mrf.mxu0
      %v1128 = vadd.f32 %v1015, %v1127
      %v1129 = vpop.f32.mrf.mxu0
      %v1130 = vadd.f32 %v1017, %v1129
      %v1131 = vpop.f32.mrf.mxu0
      %v1132 = vadd.f32 %v1019, %v1131
      %v1133 = vpop.f32.mrf.mxu0
      %v1134 = vadd.f32 %v1021, %v1133
      %1135 = vmatprep.mubr.bf16.mxu0 %v433
      %1136 = vmatmul.mubr.bf16.gmra.mxu0 %v432
      %v1137 = vpop.f32.mrf.mxu0
      %v1138 = vadd.f32 %v1025, %v1137
      %v1139 = vpop.f32.mrf.mxu0
      %v1140 = vadd.f32 %v1027, %v1139
      %v1141 = vpop.f32.mrf.mxu0
      %v1142 = vadd.f32 %v1029, %v1141
      %v1143 = vpop.f32.mrf.mxu0
      %v1144 = vadd.f32 %v1031, %v1143
      %1145 = vmatprep.mubr.bf16.mxu0 %v443
      %1146 = vmatmul.mubr.bf16.gmra.mxu0 %v442
      %v1147 = vpop.f32.mrf.mxu0
      %v1148 = vadd.f32 %v1035, %v1147
      %v1149 = vpop.f32.mrf.mxu0
      %v1150 = vadd.f32 %v1037, %v1149
      %v1151 = vpop.f32.mrf.mxu0
      %v1152 = vadd.f32 %v1039, %v1151
      %v1153 = vpop.f32.mrf.mxu0
      %v1154 = vadd.f32 %v1041, %v1153
      %1155 = vmatprep.mubr.bf16.mxu0 %v453
      %1156 = vmatmul.mubr.bf16.gmra.mxu0 %v452
      %v1157 = vpop.f32.mrf.mxu0
      %v1158 = vadd.f32 %v1045, %v1157
      %v1159 = vpop.f32.mrf.mxu0
      %v1160 = vadd.f32 %v1047, %v1159
      %v1161 = vpop.f32.mrf.mxu0
      %v1162 = vadd.f32 %v1049, %v1161
      %v1163 = vpop.f32.mrf.mxu0
      %v1164 = vadd.f32 %v1051, %v1163
      %1165 = vmatprep.mubr.bf16.mxu0 %v463
      %1166 = vmatmul.mubr.bf16.gmra.mxu0 %v462
      %v1167 = vpop.f32.mrf.mxu0
      %v1168 = vadd.f32 %v1055, %v1167
      %v1169 = vpop.f32.mrf.mxu0
      %v1170 = vadd.f32 %v1057, %v1169
      %v1171 = vpop.f32.mrf.mxu0
      %v1172 = vadd.f32 %v1059, %v1171
      %v1173 = vpop.f32.mrf.mxu0
      %v1174 = vadd.f32 %v1061, %v1173
      %1175 = vmatprep.mubr.bf16.mxu0 %v473
      %1176 = vmatmul.mubr.bf16.gmra.mxu0 %v472
      %v1177 = vpop.f32.mrf.mxu0
      %v1178 = vadd.f32 %v1065, %v1177
      %v1179 = vpop.f32.mrf.mxu0
      %v1180 = vadd.f32 %v1067, %v1179
      %v1181 = vpop.f32.mrf.mxu0
      %v1182 = vadd.f32 %v1069, %v1181
      %v1183 = vpop.f32.mrf.mxu0
      %v1184 = vadd.f32 %v1071, %v1183
      %1185 = vmatprep.mubr.bf16.mxu0 %v483
      %1186 = vmatmul.mubr.bf16.gmra.mxu0 %v482
      %v1187 = vpop.f32.mrf.mxu0
      %v1188 = vadd.f32 %v1075, %v1187
      %v1189 = vpop.f32.mrf.mxu0
      %v1190 = vadd.f32 %v1077, %v1189
      %v1191 = vpop.f32.mrf.mxu0
      %v1192 = vadd.f32 %v1079, %v1191
      %v1193 = vpop.f32.mrf.mxu0
      %v1194 = vadd.f32 %v1081, %v1193
      %1195 = vdwg.mxu0
      %1196 = vmatprep.subr.bf16.mxu0 %v889
      %1197 = vmatpush1.bf16.msra.mxu0 %v888
      %1198 = vmatprep.subr.bf16.mxu0 %v887
      %1199 = vmatpush1.bf16.msra.mxu0 %v886
      %1200 = vmatprep.subr.bf16.mxu0 %v885
      %1201 = vmatpush1.bf16.msra.mxu0 %v884
      %1202 = vmatprep.subr.bf16.mxu0 %v883
      %1203 = vmatpush1.bf16.msra.mxu0 %v882
      %1204 = vmatprep.subr.bf16.mxu0 %v881
      %1205 = vmatpush1.bf16.msra.mxu0 %v880
      %1206 = vmatprep.subr.bf16.mxu0 %v879
      %1207 = vmatpush1.bf16.msra.mxu0 %v878
      %1208 = vmatprep.subr.bf16.mxu0 %v877
      %1209 = vmatpush1.bf16.msra.mxu0 %v876
      %1210 = vmatprep.subr.bf16.mxu0 %v875
      %1211 = vmatpush1.bf16.msra.mxu0 %v874
      %1212 = vmatprep.subr.bf16.mxu0 %v905
      %1213 = vmatpush2.bf16.msra.mxu0 %v904
      %1214 = vmatprep.subr.bf16.mxu0 %v903
      %1215 = vmatpush2.bf16.msra.mxu0 %v902
      %1216 = vmatprep.subr.bf16.mxu0 %v901
      %1217 = vmatpush2.bf16.msra.mxu0 %v900
      %1218 = vmatprep.subr.bf16.mxu0 %v899
      %1219 = vmatpush2.bf16.msra.mxu0 %v898
      %1220 = vmatprep.subr.bf16.mxu0 %v897
      %1221 = vmatpush2.bf16.msra.mxu0 %v896
      %1222 = vmatprep.subr.bf16.mxu0 %v895
      %1223 = vmatpush2.bf16.msra.mxu0 %v894
      %1224 = vmatprep.subr.bf16.mxu0 %v893
      %1225 = vmatpush2.bf16.msra.mxu0 %v892
      %1226 = vmatprep.subr.bf16.mxu0 %v891
      %1227 = vmatpush2.bf16.msra.mxu0 %v890
      %1228 = vmatprep.mubr.bf16.mxu0 %v415
      %1229 = vmatmul.mubr.bf16.gmra.mxu0 %v414
      %v1230 = vpop.f32.mrf.mxu0
      %v1231 = vadd.f32 %v1118, %v1230
      %v1232 = vpop.f32.mrf.mxu0
      %v1233 = vadd.f32 %v1120, %v1232
      %v1234 = vpop.f32.mrf.mxu0
      %v1235 = vadd.f32 %v1122, %v1234
      %v1236 = vpop.f32.mrf.mxu0
      %v1237 = vadd.f32 %v1124, %v1236
      %1238 = vmatprep.mubr.bf16.mxu0 %v425
      %1239 = vmatmul.mubr.bf16.gmra.mxu0 %v424
      %v1240 = vpop.f32.mrf.mxu0
      %v1241 = vadd.f32 %v1128, %v1240
      %v1242 = vpop.f32.mrf.mxu0
      %v1243 = vadd.f32 %v1130, %v1242
      %v1244 = vpop.f32.mrf.mxu0
      %v1245 = vadd.f32 %v1132, %v1244
      %v1246 = vpop.f32.mrf.mxu0
      %v1247 = vadd.f32 %v1134, %v1246
      %1248 = vmatprep.mubr.bf16.mxu0 %v435
      %1249 = vmatmul.mubr.bf16.gmra.mxu0 %v434
      %v1250 = vpop.f32.mrf.mxu0
      %v1251 = vadd.f32 %v1138, %v1250
      %v1252 = vpop.f32.mrf.mxu0
      %v1253 = vadd.f32 %v1140, %v1252
      %v1254 = vpop.f32.mrf.mxu0
      %v1255 = vadd.f32 %v1142, %v1254
      %v1256 = vpop.f32.mrf.mxu0
      %v1257 = vadd.f32 %v1144, %v1256
      %1258 = vmatprep.mubr.bf16.mxu0 %v445
      %1259 = vmatmul.mubr.bf16.gmra.mxu0 %v444
      %v1260 = vpop.f32.mrf.mxu0
      %v1261 = vadd.f32 %v1148, %v1260
      %v1262 = vpop.f32.mrf.mxu0
      %v1263 = vadd.f32 %v1150, %v1262
      %v1264 = vpop.f32.mrf.mxu0
      %v1265 = vadd.f32 %v1152, %v1264
      %v1266 = vpop.f32.mrf.mxu0
      %v1267 = vadd.f32 %v1154, %v1266
      %1268 = vmatprep.mubr.bf16.mxu0 %v455
      %1269 = vmatmul.mubr.bf16.gmra.mxu0 %v454
      %v1270 = vpop.f32.mrf.mxu0
      %v1271 = vadd.f32 %v1158, %v1270
      %v1272 = vpop.f32.mrf.mxu0
      %v1273 = vadd.f32 %v1160, %v1272
      %v1274 = vpop.f32.mrf.mxu0
      %v1275 = vadd.f32 %v1162, %v1274
      %v1276 = vpop.f32.mrf.mxu0
      %v1277 = vadd.f32 %v1164, %v1276
      %1278 = vmatprep.mubr.bf16.mxu0 %v465
      %1279 = vmatmul.mubr.bf16.gmra.mxu0 %v464
      %v1280 = vpop.f32.mrf.mxu0
      %v1281 = vadd.f32 %v1168, %v1280
      %v1282 = vpop.f32.mrf.mxu0
      %v1283 = vadd.f32 %v1170, %v1282
      %v1284 = vpop.f32.mrf.mxu0
      %v1285 = vadd.f32 %v1172, %v1284
      %v1286 = vpop.f32.mrf.mxu0
      %v1287 = vadd.f32 %v1174, %v1286
      %1288 = vmatprep.mubr.bf16.mxu0 %v475
      %1289 = vmatmul.mubr.bf16.gmra.mxu0 %v474
      %v1290 = vpop.f32.mrf.mxu0
      %v1291 = vadd.f32 %v1178, %v1290
      %v1292 = vpop.f32.mrf.mxu0
      %v1293 = vadd.f32 %v1180, %v1292
      %v1294 = vpop.f32.mrf.mxu0
      %v1295 = vadd.f32 %v1182, %v1294
      %v1296 = vpop.f32.mrf.mxu0
      %v1297 = vadd.f32 %v1184, %v1296
      %1298 = vmatprep.mubr.bf16.mxu0 %v485
      %1299 = vmatmul.mubr.bf16.gmra.mxu0 %v484
      %v1300 = vpop.f32.mrf.mxu0
      %v1301 = vadd.f32 %v1188, %v1300
      %v1302 = vpop.f32.mrf.mxu0
      %v1303 = vadd.f32 %v1190, %v1302
      %v1304 = vpop.f32.mrf.mxu0
      %v1305 = vadd.f32 %v1192, %v1304
      %v1306 = vpop.f32.mrf.mxu0
      %v1307 = vadd.f32 %v1194, %v1306
      %1308 = vdwg.mxu0
      %1309 = vmatprep.subr.bf16.mxu0 %v921
      %1310 = vmatpush1.bf16.msra.mxu0 %v920
      %1311 = vmatprep.subr.bf16.mxu0 %v919
      %1312 = vmatpush1.bf16.msra.mxu0 %v918
      %1313 = vmatprep.subr.bf16.mxu0 %v917
      %1314 = vmatpush1.bf16.msra.mxu0 %v916
      %1315 = vmatprep.subr.bf16.mxu0 %v915
      %1316 = vmatpush1.bf16.msra.mxu0 %v914
      %1317 = vmatprep.subr.bf16.mxu0 %v913
      %1318 = vmatpush1.bf16.msra.mxu0 %v912
      %1319 = vmatprep.subr.bf16.mxu0 %v911
      %1320 = vmatpush1.bf16.msra.mxu0 %v910
      %1321 = vmatprep.subr.bf16.mxu0 %v909
      %1322 = vmatpush1.bf16.msra.mxu0 %v908
      %1323 = vmatprep.subr.bf16.mxu0 %v907
      %1324 = vmatpush1.bf16.msra.mxu0 %v906
      %1325 = vmatprep.subr.bf16.mxu0 %v937
      %1326 = vmatpush2.bf16.msra.mxu0 %v936
      %1327 = vmatprep.subr.bf16.mxu0 %v935
      %1328 = vmatpush2.bf16.msra.mxu0 %v934
      %1329 = vmatprep.subr.bf16.mxu0 %v933
      %1330 = vmatpush2.bf16.msra.mxu0 %v932
      %1331 = vmatprep.subr.bf16.mxu0 %v931
      %1332 = vmatpush2.bf16.msra.mxu0 %v930
      %1333 = vmatprep.subr.bf16.mxu0 %v929
      %1334 = vmatpush2.bf16.msra.mxu0 %v928
      %1335 = vmatprep.subr.bf16.mxu0 %v927
      %1336 = vmatpush2.bf16.msra.mxu0 %v926
      %1337 = vmatprep.subr.bf16.mxu0 %v925
      %1338 = vmatpush2.bf16.msra.mxu0 %v924
      %1339 = vmatprep.subr.bf16.mxu0 %v923
      %1340 = vmatpush2.bf16.msra.mxu0 %v922
      %1341 = vmatprep.mubr.bf16.mxu0 %v417
      %1342 = vmatmul.mubr.bf16.gmra.mxu0 %v416
      %v1343 = vpop.f32.mrf.mxu0
      %v1344 = vadd.f32 %v1231, %v1343
      %v1345 = vpop.f32.mrf.mxu0
      %v1346 = vadd.f32 %v1233, %v1345
      %v1347 = vpop.f32.mrf.mxu0
      %v1348 = vadd.f32 %v1235, %v1347
      %v1349 = vpop.f32.mrf.mxu0
      %v1350 = vadd.f32 %v1237, %v1349
      %1351 = vmatprep.mubr.bf16.mxu0 %v427
      %1352 = vmatmul.mubr.bf16.gmra.mxu0 %v426
      %v1353 = vpop.f32.mrf.mxu0
      %v1354 = vadd.f32 %v1241, %v1353
      %v1355 = vpop.f32.mrf.mxu0
      %v1356 = vadd.f32 %v1243, %v1355
      %v1357 = vpop.f32.mrf.mxu0
      %v1358 = vadd.f32 %v1245, %v1357
      %v1359 = vpop.f32.mrf.mxu0
      %v1360 = vadd.f32 %v1247, %v1359
      %1361 = vmatprep.mubr.bf16.mxu0 %v437
      %1362 = vmatmul.mubr.bf16.gmra.mxu0 %v436
      %v1363 = vpop.f32.mrf.mxu0
      %v1364 = vadd.f32 %v1251, %v1363
      %v1365 = vpop.f32.mrf.mxu0
      %v1366 = vadd.f32 %v1253, %v1365
      %v1367 = vpop.f32.mrf.mxu0
      %v1368 = vadd.f32 %v1255, %v1367
      %v1369 = vpop.f32.mrf.mxu0
      %v1370 = vadd.f32 %v1257, %v1369
      %1371 = vmatprep.mubr.bf16.mxu0 %v447
      %1372 = vmatmul.mubr.bf16.gmra.mxu0 %v446
      %v1373 = vpop.f32.mrf.mxu0
      %v1374 = vadd.f32 %v1261, %v1373
      %v1375 = vpop.f32.mrf.mxu0
      %v1376 = vadd.f32 %v1263, %v1375
      %v1377 = vpop.f32.mrf.mxu0
      %v1378 = vadd.f32 %v1265, %v1377
      %v1379 = vpop.f32.mrf.mxu0
      %v1380 = vadd.f32 %v1267, %v1379
      %1381 = vmatprep.mubr.bf16.mxu0 %v457
      %1382 = vmatmul.mubr.bf16.gmra.mxu0 %v456
      %v1383 = vpop.f32.mrf.mxu0
      %v1384 = vadd.f32 %v1271, %v1383
      %v1385 = vpop.f32.mrf.mxu0
      %v1386 = vadd.f32 %v1273, %v1385
      %v1387 = vpop.f32.mrf.mxu0
      %v1388 = vadd.f32 %v1275, %v1387
      %v1389 = vpop.f32.mrf.mxu0
      %v1390 = vadd.f32 %v1277, %v1389
      %1391 = vmatprep.mubr.bf16.mxu0 %v467
      %1392 = vmatmul.mubr.bf16.gmra.mxu0 %v466
      %v1393 = vpop.f32.mrf.mxu0
      %v1394 = vadd.f32 %v1281, %v1393
      %v1395 = vpop.f32.mrf.mxu0
      %v1396 = vadd.f32 %v1283, %v1395
      %v1397 = vpop.f32.mrf.mxu0
      %v1398 = vadd.f32 %v1285, %v1397
      %v1399 = vpop.f32.mrf.mxu0
      %v1400 = vadd.f32 %v1287, %v1399
      %1401 = vmatprep.mubr.bf16.mxu0 %v477
      %1402 = vmatmul.mubr.bf16.gmra.mxu0 %v476
      %v1403 = vpop.f32.mrf.mxu0
      %v1404 = vadd.f32 %v1291, %v1403
      %v1405 = vpop.f32.mrf.mxu0
      %v1406 = vadd.f32 %v1293, %v1405
      %v1407 = vpop.f32.mrf.mxu0
      %v1408 = vadd.f32 %v1295, %v1407
      %v1409 = vpop.f32.mrf.mxu0
      %v1410 = vadd.f32 %v1297, %v1409
      %1411 = vmatprep.mubr.bf16.mxu0 %v487
      %1412 = vmatmul.mubr.bf16.gmra.mxu0 %v486
      %v1413 = vpop.f32.mrf.mxu0
      %v1414 = vadd.f32 %v1301, %v1413
      %v1415 = vpop.f32.mrf.mxu0
      %v1416 = vadd.f32 %v1303, %v1415
      %v1417 = vpop.f32.mrf.mxu0
      %v1418 = vadd.f32 %v1305, %v1417
      %v1419 = vpop.f32.mrf.mxu0
      %v1420 = vadd.f32 %v1307, %v1419
      %1421 = vdwg.mxu0
      %1422 = vmatprep.subr.bf16.mxu0 %v953
      %1423 = vmatpush1.bf16.msra.mxu0 %v952
      %1424 = vmatprep.subr.bf16.mxu0 %v951
      %1425 = vmatpush1.bf16.msra.mxu0 %v950
      %1426 = vmatprep.subr.bf16.mxu0 %v949
      %1427 = vmatpush1.bf16.msra.mxu0 %v948
      %1428 = vmatprep.subr.bf16.mxu0 %v947
      %1429 = vmatpush1.bf16.msra.mxu0 %v946
      %1430 = vmatprep.subr.bf16.mxu0 %v945
      %1431 = vmatpush1.bf16.msra.mxu0 %v944
      %1432 = vmatprep.subr.bf16.mxu0 %v943
      %1433 = vmatpush1.bf16.msra.mxu0 %v942
      %1434 = vmatprep.subr.bf16.mxu0 %v941
      %1435 = vmatpush1.bf16.msra.mxu0 %v940
      %1436 = vmatprep.subr.bf16.mxu0 %v939
      %1437 = vmatpush1.bf16.msra.mxu0 %v938
      %1438 = vmatprep.subr.bf16.mxu0 %v969
      %1439 = vmatpush2.bf16.msra.mxu0 %v968
      %1440 = vmatprep.subr.bf16.mxu0 %v967
      %1441 = vmatpush2.bf16.msra.mxu0 %v966
      %1442 = vmatprep.subr.bf16.mxu0 %v965
      %1443 = vmatpush2.bf16.msra.mxu0 %v964
      %1444 = vmatprep.subr.bf16.mxu0 %v963
      %1445 = vmatpush2.bf16.msra.mxu0 %v962
      %1446 = vmatprep.subr.bf16.mxu0 %v961
      %1447 = vmatpush2.bf16.msra.mxu0 %v960
      %1448 = vmatprep.subr.bf16.mxu0 %v959
      %1449 = vmatpush2.bf16.msra.mxu0 %v958
      %1450 = vmatprep.subr.bf16.mxu0 %v957
      %1451 = vmatpush2.bf16.msra.mxu0 %v956
      %1452 = vmatprep.subr.bf16.mxu0 %v955
      %1453 = vmatpush2.bf16.msra.mxu0 %v954
      %1454 = vmatprep.mubr.bf16.mxu0 %v419
      %1455 = vmatmul.mubr.bf16.gmra.mxu0 %v418
      %v1456 = vpop.f32.mrf.mxu0
      %v1457 = vadd.f32 %v1344, %v1456
      %v1458 = vpop.f32.mrf.mxu0
      %v1459 = vadd.f32 %v1346, %v1458
      %v1460 = vpop.f32.mrf.mxu0
      %v1461 = vadd.f32 %v1348, %v1460
      %v1462 = vpop.f32.mrf.mxu0
      %v1463 = vadd.f32 %v1350, %v1462
      %1464 = vmatprep.mubr.bf16.mxu0 %v429
      %1465 = vmatmul.mubr.bf16.gmra.mxu0 %v428
      %v1466 = vpop.f32.mrf.mxu0
      %v1467 = vadd.f32 %v1354, %v1466
      %v1468 = vpop.f32.mrf.mxu0
      %v1469 = vadd.f32 %v1356, %v1468
      %v1470 = vpop.f32.mrf.mxu0
      %v1471 = vadd.f32 %v1358, %v1470
      %v1472 = vpop.f32.mrf.mxu0
      %v1473 = vadd.f32 %v1360, %v1472
      %1474 = vmatprep.mubr.bf16.mxu0 %v439
      %1475 = vmatmul.mubr.bf16.gmra.mxu0 %v438
      %v1476 = vpop.f32.mrf.mxu0
      %v1477 = vadd.f32 %v1364, %v1476
      %v1478 = vpop.f32.mrf.mxu0
      %v1479 = vadd.f32 %v1366, %v1478
      %v1480 = vpop.f32.mrf.mxu0
      %v1481 = vadd.f32 %v1368, %v1480
      %v1482 = vpop.f32.mrf.mxu0
      %v1483 = vadd.f32 %v1370, %v1482
      %1484 = vmatprep.mubr.bf16.mxu0 %v449
      %1485 = vmatmul.mubr.bf16.gmra.mxu0 %v448
      %v1486 = vpop.f32.mrf.mxu0
      %v1487 = vadd.f32 %v1374, %v1486
      %v1488 = vpop.f32.mrf.mxu0
      %v1489 = vadd.f32 %v1376, %v1488
      %v1490 = vpop.f32.mrf.mxu0
      %v1491 = vadd.f32 %v1378, %v1490
      %v1492 = vpop.f32.mrf.mxu0
      %v1493 = vadd.f32 %v1380, %v1492
      %1494 = vmatprep.mubr.bf16.mxu0 %v459
      %1495 = vmatmul.mubr.bf16.gmra.mxu0 %v458
      %v1496 = vpop.f32.mrf.mxu0
      %v1497 = vadd.f32 %v1384, %v1496
      %v1498 = vpop.f32.mrf.mxu0
      %v1499 = vadd.f32 %v1386, %v1498
      %v1500 = vpop.f32.mrf.mxu0
      %v1501 = vadd.f32 %v1388, %v1500
      %v1502 = vpop.f32.mrf.mxu0
      %v1503 = vadd.f32 %v1390, %v1502
      %1504 = vmatprep.mubr.bf16.mxu0 %v469
      %1505 = vmatmul.mubr.bf16.gmra.mxu0 %v468
      %v1506 = vpop.f32.mrf.mxu0
      %v1507 = vadd.f32 %v1394, %v1506
      %v1508 = vpop.f32.mrf.mxu0
      %v1509 = vadd.f32 %v1396, %v1508
      %v1510 = vpop.f32.mrf.mxu0
      %v1511 = vadd.f32 %v1398, %v1510
      %v1512 = vpop.f32.mrf.mxu0
      %v1513 = vadd.f32 %v1400, %v1512
      %1514 = vmatprep.mubr.bf16.mxu0 %v479
      %1515 = vmatmul.mubr.bf16.gmra.mxu0 %v478
      %v1516 = vpop.f32.mrf.mxu0
      %v1517 = vadd.f32 %v1404, %v1516
      %v1518 = vpop.f32.mrf.mxu0
      %v1519 = vadd.f32 %v1406, %v1518
      %v1520 = vpop.f32.mrf.mxu0
      %v1521 = vadd.f32 %v1408, %v1520
      %v1522 = vpop.f32.mrf.mxu0
      %v1523 = vadd.f32 %v1410, %v1522
      %1524 = vmatprep.mubr.bf16.mxu0 %v489
      %1525 = vmatmul.mubr.bf16.gmra.mxu0 %v488
      %v1526 = vpop.f32.mrf.mxu0
      %v1527 = vadd.f32 %v1414, %v1526
      %v1528 = vpop.f32.mrf.mxu0
      %v1529 = vadd.f32 %v1416, %v1528
      %v1530 = vpop.f32.mrf.mxu0
      %v1531 = vadd.f32 %v1418, %v1530
      %v1532 = vpop.f32.mrf.mxu0
      %v1533 = vadd.f32 %v1420, %v1532
      %1534 = vdwg.mxu0
      %vm1535 = vcmask 556032
      %v1536 = vsel %vm1535, %v1459, 0.0
      %v1537 = vadd.f32 %v1457, %v1536
      %1538 = vadd.xlane.f32.xlu0 %v1537
      %v1539 = vpop.xlane.xlu0 %1538
      %v1540 = vsel %vm1535, %v1463, 0.0
      %v1541 = vadd.f32 %v1461, %v1540
      %1542 = vadd.xlane.f32.xlu0 %v1541
      %v1543 = vpop.xlane.xlu0 %1542
      %v1544 = vsel %vm1535, %v1469, 0.0
      %v1545 = vadd.f32 %v1467, %v1544
      %1546 = vadd.xlane.f32.xlu0 %v1545
      %v1547 = vpop.xlane.xlu0 %1546
      %v1548 = vsel %vm1535, %v1473, 0.0
      %v1549 = vadd.f32 %v1471, %v1548
      %1550 = vadd.xlane.f32.xlu0 %v1549
      %v1551 = vpop.xlane.xlu0 %1550
      %v1552 = vsel %vm1535, %v1479, 0.0
      %v1553 = vadd.f32 %v1477, %v1552
      %1554 = vadd.xlane.f32.xlu0 %v1553
      %v1555 = vpop.xlane.xlu0 %1554
      %v1556 = vsel %vm1535, %v1483, 0.0
      %v1557 = vadd.f32 %v1481, %v1556
      %1558 = vadd.xlane.f32.xlu0 %v1557
      %v1559 = vpop.xlane.xlu0 %1558
      %v1560 = vsel %vm1535, %v1489, 0.0
      %v1561 = vadd.f32 %v1487, %v1560
      %1562 = vadd.xlane.f32.xlu0 %v1561
      %v1563 = vpop.xlane.xlu0 %1562
      %v1564 = vsel %vm1535, %v1493, 0.0
      %v1565 = vadd.f32 %v1491, %v1564
      %1566 = vadd.xlane.f32.xlu0 %v1565
      %v1567 = vpop.xlane.xlu0 %1566
      %v1568 = vsel %vm1535, %v1499, 0.0
      %v1569 = vadd.f32 %v1497, %v1568
      %1570 = vadd.xlane.f32.xlu0 %v1569
      %v1571 = vpop.xlane.xlu0 %1570
      %v1572 = vsel %vm1535, %v1503, 0.0
      %v1573 = vadd.f32 %v1501, %v1572
      %1574 = vadd.xlane.f32.xlu0 %v1573
      %v1575 = vpop.xlane.xlu0 %1574
      %v1576 = vsel %vm1535, %v1509, 0.0
      %v1577 = vadd.f32 %v1507, %v1576
      %1578 = vadd.xlane.f32.xlu0 %v1577
      %v1579 = vpop.xlane.xlu0 %1578
      %v1580 = vsel %vm1535, %v1513, 0.0
      %v1581 = vadd.f32 %v1511, %v1580
      %1582 = vadd.xlane.f32.xlu0 %v1581
      %v1583 = vpop.xlane.xlu0 %1582
      %v1584 = vsel %vm1535, %v1519, 0.0
      %v1585 = vadd.f32 %v1517, %v1584
      %1586 = vadd.xlane.f32.xlu0 %v1585
      %v1587 = vpop.xlane.xlu0 %1586
      %v1588 = vsel %vm1535, %v1523, 0.0
      %v1589 = vadd.f32 %v1521, %v1588
      %1590 = vadd.xlane.f32.xlu0 %v1589
      %v1591 = vpop.xlane.xlu0 %1590
      %v1592 = vsel %vm1535, %v1529, 0.0
      %v1593 = vadd.f32 %v1527, %v1592
      %1594 = vadd.xlane.f32.xlu0 %v1593
      %v1595 = vpop.xlane.xlu0 %1594
      %v1596 = vsel %vm1535, %v1533, 0.0
      %v1597 = vadd.f32 %v1531, %v1596
      %1598 = vadd.xlane.f32.xlu0 %v1597
      %v1599 = vpop.xlane.xlu0 %1598
      %v1600 = vmul.f32 %v1539, 0.0051020407
      %v1601 = vmul.f32 %v1543, 0.0051020407
      %v1602 = vmul.f32 %v1547, 0.0051020407
      %v1603 = vmul.f32 %v1551, 0.0051020407
      %v1604 = vmul.f32 %v1555, 0.0051020407
      %v1605 = vmul.f32 %v1559, 0.0051020407
      %v1606 = vmul.f32 %v1563, 0.0051020407
      %v1607 = vmul.f32 %v1567, 0.0051020407
      %v1608 = vmul.f32 %v1571, 0.0051020407
      %v1609 = vmul.f32 %v1575, 0.0051020407
      %v1610 = vmul.f32 %v1579, 0.0051020407
      %v1611 = vmul.f32 %v1583, 0.0051020407
      %v1612 = vmul.f32 %v1587, 0.0051020407
      %v1613 = vmul.f32 %v1591, 0.0051020407
      %v1614 = vmul.f32 %v1595, 0.0051020407
      %v1615 = vmul.f32 %v1599, 0.0051020407
      %v1616 = vsub.f32 %v1457, %v1600
      %v1617 = vsub.f32 %v1459, %v1600
      %v1618 = vsub.f32 %v1461, %v1601
      %v1619 = vsub.f32 %v1463, %v1601
      %v1620 = vsub.f32 %v1467, %v1602
      %v1621 = vsub.f32 %v1469, %v1602
      %v1622 = vsub.f32 %v1471, %v1603
      %v1623 = vsub.f32 %v1473, %v1603
      %v1624 = vsub.f32 %v1477, %v1604
      %v1625 = vsub.f32 %v1479, %v1604
      %v1626 = vsub.f32 %v1481, %v1605
      %v1627 = vsub.f32 %v1483, %v1605
      %v1628 = vsub.f32 %v1487, %v1606
      %v1629 = vsub.f32 %v1489, %v1606
      %v1630 = vsub.f32 %v1491, %v1607
      %v1631 = vsub.f32 %v1493, %v1607
      %v1632 = vsub.f32 %v1497, %v1608
      %v1633 = vsub.f32 %v1499, %v1608
      %v1634 = vsub.f32 %v1501, %v1609
      %v1635 = vsub.f32 %v1503, %v1609
      %v1636 = vsub.f32 %v1507, %v1610
      %v1637 = vsub.f32 %v1509, %v1610
      %v1638 = vsub.f32 %v1511, %v1611
      %v1639 = vsub.f32 %v1513, %v1611
      %v1640 = vsub.f32 %v1517, %v1612
      %v1641 = vsub.f32 %v1519, %v1612
      %v1642 = vsub.f32 %v1521, %v1613
      %v1643 = vsub.f32 %v1523, %v1613
      %v1644 = vsub.f32 %v1527, %v1614
      %v1645 = vsub.f32 %v1529, %v1614
      %v1646 = vsub.f32 %v1531, %v1615
      %v1647 = vsub.f32 %v1533, %v1615
      %v1648 = vmul.f32 %v1616, %v1616
      %v1649 = vmul.f32 %v1617, %v1617
      %v1650 = vmul.f32 %v1618, %v1618
      %v1651 = vmul.f32 %v1619, %v1619
      %v1652 = vmul.f32 %v1620, %v1620
      %v1653 = vmul.f32 %v1621, %v1621
      %v1654 = vmul.f32 %v1622, %v1622
      %v1655 = vmul.f32 %v1623, %v1623
      %v1656 = vmul.f32 %v1624, %v1624
      %v1657 = vmul.f32 %v1625, %v1625
      %v1658 = vmul.f32 %v1626, %v1626
      %v1659 = vmul.f32 %v1627, %v1627
      %v1660 = vmul.f32 %v1628, %v1628
      %v1661 = vmul.f32 %v1629, %v1629
      %v1662 = vmul.f32 %v1630, %v1630
      %v1663 = vmul.f32 %v1631, %v1631
      %v1664 = vmul.f32 %v1632, %v1632
      %v1665 = vmul.f32 %v1633, %v1633
      %v1666 = vmul.f32 %v1634, %v1634
      %v1667 = vmul.f32 %v1635, %v1635
      %v1668 = vmul.f32 %v1636, %v1636
      %v1669 = vmul.f32 %v1637, %v1637
      %v1670 = vmul.f32 %v1638, %v1638
      %v1671 = vmul.f32 %v1639, %v1639
      %v1672 = vmul.f32 %v1640, %v1640
      %v1673 = vmul.f32 %v1641, %v1641
      %v1674 = vmul.f32 %v1642, %v1642
      %v1675 = vmul.f32 %v1643, %v1643
      %v1676 = vmul.f32 %v1644, %v1644
      %v1677 = vmul.f32 %v1645, %v1645
      %v1678 = vmul.f32 %v1646, %v1646
      %v1679 = vmul.f32 %v1647, %v1647
      %v1680 = vsel %vm1535, %v1649, 0.0
      %v1681 = vadd.f32 %v1648, %v1680
      %1682 = vadd.xlane.f32.xlu0 %v1681
      %v1683 = vpop.xlane.xlu0 %1682
      %v1684 = vsel %vm1535, %v1651, 0.0
      %v1685 = vadd.f32 %v1650, %v1684
      %1686 = vadd.xlane.f32.xlu0 %v1685
      %v1687 = vpop.xlane.xlu0 %1686
      %v1688 = vsel %vm1535, %v1653, 0.0
      %v1689 = vadd.f32 %v1652, %v1688
      %1690 = vadd.xlane.f32.xlu0 %v1689
      %v1691 = vpop.xlane.xlu0 %1690
      %v1692 = vsel %vm1535, %v1655, 0.0
      %v1693 = vadd.f32 %v1654, %v1692
      %1694 = vadd.xlane.f32.xlu0 %v1693
      %v1695 = vpop.xlane.xlu0 %1694
      %v1696 = vsel %vm1535, %v1657, 0.0
      %v1697 = vadd.f32 %v1656, %v1696
      %1698 = vadd.xlane.f32.xlu0 %v1697
      %v1699 = vpop.xlane.xlu0 %1698
      %v1700 = vsel %vm1535, %v1659, 0.0
      %v1701 = vadd.f32 %v1658, %v1700
      %1702 = vadd.xlane.f32.xlu0 %v1701
      %v1703 = vpop.xlane.xlu0 %1702
      %v1704 = vsel %vm1535, %v1661, 0.0
      %v1705 = vadd.f32 %v1660, %v1704
      %1706 = vadd.xlane.f32.xlu0 %v1705
      %v1707 = vpop.xlane.xlu0 %1706
      %v1708 = vsel %vm1535, %v1663, 0.0
      %v1709 = vadd.f32 %v1662, %v1708
      %1710 = vadd.xlane.f32.xlu0 %v1709
      %v1711 = vpop.xlane.xlu0 %1710
      %v1712 = vsel %vm1535, %v1665, 0.0
      %v1713 = vadd.f32 %v1664, %v1712
      %1714 = vadd.xlane.f32.xlu0 %v1713
      %v1715 = vpop.xlane.xlu0 %1714
      %v1716 = vsel %vm1535, %v1667, 0.0
      %v1717 = vadd.f32 %v1666, %v1716
      %1718 = vadd.xlane.f32.xlu0 %v1717
      %v1719 = vpop.xlane.xlu0 %1718
      %v1720 = vsel %vm1535, %v1669, 0.0
      %v1721 = vadd.f32 %v1668, %v1720
      %1722 = vadd.xlane.f32.xlu0 %v1721
      %v1723 = vpop.xlane.xlu0 %1722
      %v1724 = vsel %vm1535, %v1671, 0.0
      %v1725 = vadd.f32 %v1670, %v1724
      %1726 = vadd.xlane.f32.xlu0 %v1725
      %v1727 = vpop.xlane.xlu0 %1726
      %v1728 = vsel %vm1535, %v1673, 0.0
      %v1729 = vadd.f32 %v1672, %v1728
      %1730 = vadd.xlane.f32.xlu0 %v1729
      %v1731 = vpop.xlane.xlu0 %1730
      %v1732 = vsel %vm1535, %v1675, 0.0
      %v1733 = vadd.f32 %v1674, %v1732
      %1734 = vadd.xlane.f32.xlu0 %v1733
      %v1735 = vpop.xlane.xlu0 %1734
      %v1736 = vsel %vm1535, %v1677, 0.0
      %v1737 = vadd.f32 %v1676, %v1736
      %1738 = vadd.xlane.f32.xlu0 %v1737
      %v1739 = vpop.xlane.xlu0 %1738
      %v1740 = vsel %vm1535, %v1679, 0.0
      %v1741 = vadd.f32 %v1678, %v1740
      %1742 = vadd.xlane.f32.xlu0 %v1741
      %v1743 = vpop.xlane.xlu0 %1742
      %v1744 = vmul.f32 %v1683, 0.0051020407
      %v1745 = vmul.f32 %v1687, 0.0051020407
      %v1746 = vmul.f32 %v1691, 0.0051020407
      %v1747 = vmul.f32 %v1695, 0.0051020407
      %v1748 = vmul.f32 %v1699, 0.0051020407
      %v1749 = vmul.f32 %v1703, 0.0051020407
      %v1750 = vmul.f32 %v1707, 0.0051020407
      %v1751 = vmul.f32 %v1711, 0.0051020407
      %v1752 = vmul.f32 %v1715, 0.0051020407
      %v1753 = vmul.f32 %v1719, 0.0051020407
      %v1754 = vmul.f32 %v1723, 0.0051020407
      %v1755 = vmul.f32 %v1727, 0.0051020407
      %v1756 = vmul.f32 %v1731, 0.0051020407
      %v1757 = vmul.f32 %v1735, 0.0051020407
      %v1758 = vmul.f32 %v1739, 0.0051020407
      %v1759 = vmul.f32 %v1743, 0.0051020407
      %v1760 = vld [vmem:[%s235] sm:$0xff]
      %v1761 = vld [vmem:[%s235 + $0x8] sm:$0xff]
      %v1762 = vld [vmem:[%s235 + $0x10] sm:$0xff]
      %v1763 = vld [vmem:[%s235 + $0x18] sm:$0xff]
      %v1764 = vld [vmem:[%s235 + $0x20] sm:$0xff]
      %v1765 = vld [vmem:[%s235 + $0x28] sm:$0xff]
      %v1766 = vld [vmem:[%s235 + $0x30] sm:$0xff]
      %v1767 = vld [vmem:[%s235 + $0x38] sm:$0xff]
      %v1768 = vld [vmem:[%s235 + $0x40] sm:$0xff]
      %v1769 = vld [vmem:[%s235 + $0x48] sm:$0xff]
      %v1770 = vld [vmem:[%s235 + $0x50] sm:$0xff]
      %v1771 = vld [vmem:[%s235 + $0x58] sm:$0xff]
      %v1772 = vld [vmem:[%s235 + $0x60] sm:$0xff]
      %v1773 = vld [vmem:[%s235 + $0x68] sm:$0xff]
      %v1774 = vld [vmem:[%s235 + $0x70] sm:$0xff]
      %v1775 = vld [vmem:[%s235 + $0x78] sm:$0xff]
      %v1776 = vadd.f32 %v1744, 1e-05
      %v1777 = vadd.f32 %v1745, 1e-05
      %v1778 = vadd.f32 %v1746, 1e-05
      %v1779 = vadd.f32 %v1747, 1e-05
      %v1780 = vadd.f32 %v1748, 1e-05
      %v1781 = vadd.f32 %v1749, 1e-05
      %v1782 = vadd.f32 %v1750, 1e-05
      %v1783 = vadd.f32 %v1751, 1e-05
      %v1784 = vadd.f32 %v1752, 1e-05
      %v1785 = vadd.f32 %v1753, 1e-05
      %v1786 = vadd.f32 %v1754, 1e-05
      %v1787 = vadd.f32 %v1755, 1e-05
      %v1788 = vadd.f32 %v1756, 1e-05
      %v1789 = vadd.f32 %v1757, 1e-05
      %v1790 = vadd.f32 %v1758, 1e-05
      %v1791 = vadd.f32 %v1759, 1e-05
      %v1792 = vrsqrt.pop %v1776
      %v1793 = vrsqrt.pop %v1777
      %v1794 = vrsqrt.pop %v1778
      %v1795 = vrsqrt.pop %v1779
      %v1796 = vrsqrt.pop %v1780
      %v1797 = vrsqrt.pop %v1781
      %v1798 = vrsqrt.pop %v1782
      %v1799 = vrsqrt.pop %v1783
      %v1800 = vrsqrt.pop %v1784
      %v1801 = vrsqrt.pop %v1785
      %v1802 = vrsqrt.pop %v1786
      %v1803 = vrsqrt.pop %v1787
      %v1804 = vrsqrt.pop %v1788
      %v1805 = vrsqrt.pop %v1789
      %v1806 = vrsqrt.pop %v1790
      %v1807 = vrsqrt.pop %v1791
      %v1808 = vmul.f32 %v1760, %v1792
      %v1809 = vmul.f32 %v1761, %v1793
      %v1810 = vmul.f32 %v1762, %v1794
      %v1811 = vmul.f32 %v1763, %v1795
      %v1812 = vmul.f32 %v1764, %v1796
      %v1813 = vmul.f32 %v1765, %v1797
      %v1814 = vmul.f32 %v1766, %v1798
      %v1815 = vmul.f32 %v1767, %v1799
      %v1816 = vmul.f32 %v1768, %v1800
      %v1817 = vmul.f32 %v1769, %v1801
      %v1818 = vmul.f32 %v1770, %v1802
      %v1819 = vmul.f32 %v1771, %v1803
      %v1820 = vmul.f32 %v1772, %v1804
      %v1821 = vmul.f32 %v1773, %v1805
      %v1822 = vmul.f32 %v1774, %v1806
      %v1823 = vmul.f32 %v1775, %v1807
      %1825 = vset.pattern.permute.xlu0 0
      %1826 = vperm.xlu0 %1825, %v1808
      %v1827 = vpop.permute.xlu0 %1826
      %1830 = vset.pattern.permute.xlu0 0
      %1831 = vperm.xlu0 %1830, %v1809
      %v1832 = vpop.permute.xlu0 %1831
      %1835 = vset.pattern.permute.xlu0 0
      %1836 = vperm.xlu0 %1835, %v1810
      %v1837 = vpop.permute.xlu0 %1836
      %1840 = vset.pattern.permute.xlu0 0
      %1841 = vperm.xlu0 %1840, %v1811
      %v1842 = vpop.permute.xlu0 %1841
      %1845 = vset.pattern.permute.xlu0 0
      %1846 = vperm.xlu0 %1845, %v1812
      %v1847 = vpop.permute.xlu0 %1846
      %1850 = vset.pattern.permute.xlu0 0
      %1851 = vperm.xlu0 %1850, %v1813
      %v1852 = vpop.permute.xlu0 %1851
      %1855 = vset.pattern.permute.xlu0 0
      %1856 = vperm.xlu0 %1855, %v1814
      %v1857 = vpop.permute.xlu0 %1856
      %1860 = vset.pattern.permute.xlu0 0
      %1861 = vperm.xlu0 %1860, %v1815
      %v1862 = vpop.permute.xlu0 %1861
      %1865 = vset.pattern.permute.xlu0 0
      %1866 = vperm.xlu0 %1865, %v1816
      %v1867 = vpop.permute.xlu0 %1866
      %1870 = vset.pattern.permute.xlu0 0
      %1871 = vperm.xlu0 %1870, %v1817
      %v1872 = vpop.permute.xlu0 %1871
      %1875 = vset.pattern.permute.xlu0 0
      %1876 = vperm.xlu0 %1875, %v1818
      %v1877 = vpop.permute.xlu0 %1876
      %1880 = vset.pattern.permute.xlu0 0
      %1881 = vperm.xlu0 %1880, %v1819
      %v1882 = vpop.permute.xlu0 %1881
      %1885 = vset.pattern.permute.xlu0 0
      %1886 = vperm.xlu0 %1885, %v1820
      %v1887 = vpop.permute.xlu0 %1886
      %1890 = vset.pattern.permute.xlu0 0
      %1891 = vperm.xlu0 %1890, %v1821
      %v1892 = vpop.permute.xlu0 %1891
      %1895 = vset.pattern.permute.xlu0 0
      %1896 = vperm.xlu0 %1895, %v1822
      %v1897 = vpop.permute.xlu0 %1896
      %1900 = vset.pattern.permute.xlu0 0
      %1901 = vperm.xlu0 %1900, %v1823
      %v1902 = vpop.permute.xlu0 %1901
      %v1904 = vmul.f32 %v1616, %v1827
      %v1905 = vmul.f32 %v1617, %v1827
      %v1906 = vmul.f32 %v1618, %v1832
      %v1907 = vmul.f32 %v1619, %v1832
      %v1908 = vmul.f32 %v1620, %v1837
      %v1909 = vmul.f32 %v1621, %v1837
      %v1910 = vmul.f32 %v1622, %v1842
      %v1911 = vmul.f32 %v1623, %v1842
      %v1912 = vmul.f32 %v1624, %v1847
      %v1913 = vmul.f32 %v1625, %v1847
      %v1914 = vmul.f32 %v1626, %v1852
      %v1915 = vmul.f32 %v1627, %v1852
      %v1916 = vmul.f32 %v1628, %v1857
      %v1917 = vmul.f32 %v1629, %v1857
      %v1918 = vmul.f32 %v1630, %v1862
      %v1919 = vmul.f32 %v1631, %v1862
      %v1920 = vmul.f32 %v1632, %v1867
      %v1921 = vmul.f32 %v1633, %v1867
      %v1922 = vmul.f32 %v1634, %v1872
      %v1923 = vmul.f32 %v1635, %v1872
      %v1924 = vmul.f32 %v1636, %v1877
      %v1925 = vmul.f32 %v1637, %v1877
      %v1926 = vmul.f32 %v1638, %v1882
      %v1927 = vmul.f32 %v1639, %v1882
      %v1928 = vmul.f32 %v1640, %v1887
      %v1929 = vmul.f32 %v1641, %v1887
      %v1930 = vmul.f32 %v1642, %v1892
      %v1931 = vmul.f32 %v1643, %v1892
      %v1932 = vmul.f32 %v1644, %v1897
      %v1933 = vmul.f32 %v1645, %v1897
      %v1934 = vmul.f32 %v1646, %v1902
      %v1935 = vmul.f32 %v1647, %v1902
      %v1936 = vld [vmem:[%s241] sm:$0xff]
      %v1937 = vld [vmem:[%s241 + $0x8] sm:$0xff]
      %v1938 = vld [vmem:[%s241 + $0x10] sm:$0xff]
      %v1939 = vld [vmem:[%s241 + $0x18] sm:$0xff]
      %v1940 = vld [vmem:[%s241 + $0x20] sm:$0xff]
      %v1941 = vld [vmem:[%s241 + $0x28] sm:$0xff]
      %v1942 = vld [vmem:[%s241 + $0x30] sm:$0xff]
      %v1943 = vld [vmem:[%s241 + $0x38] sm:$0xff]
      %v1944 = vld [vmem:[%s241 + $0x40] sm:$0xff]
      %v1945 = vld [vmem:[%s241 + $0x48] sm:$0xff]
      %v1946 = vld [vmem:[%s241 + $0x50] sm:$0xff]
      %v1947 = vld [vmem:[%s241 + $0x58] sm:$0xff]
      %v1948 = vld [vmem:[%s241 + $0x60] sm:$0xff]
      %v1949 = vld [vmem:[%s241 + $0x68] sm:$0xff]
      %v1950 = vld [vmem:[%s241 + $0x70] sm:$0xff]
      %v1951 = vld [vmem:[%s241 + $0x78] sm:$0xff]
      %1953 = vset.pattern.permute.xlu0 0
      %1954 = vperm.xlu0 %1953, %v1936
      %v1955 = vpop.permute.xlu0 %1954
      %1958 = vset.pattern.permute.xlu0 0
      %1959 = vperm.xlu0 %1958, %v1937
      %v1960 = vpop.permute.xlu0 %1959
      %1963 = vset.pattern.permute.xlu0 0
      %1964 = vperm.xlu0 %1963, %v1938
      %v1965 = vpop.permute.xlu0 %1964
      %1968 = vset.pattern.permute.xlu0 0
      %1969 = vperm.xlu0 %1968, %v1939
      %v1970 = vpop.permute.xlu0 %1969
      %1973 = vset.pattern.permute.xlu0 0
      %1974 = vperm.xlu0 %1973, %v1940
      %v1975 = vpop.permute.xlu0 %1974
      %1978 = vset.pattern.permute.xlu0 0
      %1979 = vperm.xlu0 %1978, %v1941
      %v1980 = vpop.permute.xlu0 %1979
      %1983 = vset.pattern.permute.xlu0 0
      %1984 = vperm.xlu0 %1983, %v1942
      %v1985 = vpop.permute.xlu0 %1984
      %1988 = vset.pattern.permute.xlu0 0
      %1989 = vperm.xlu0 %1988, %v1943
      %v1990 = vpop.permute.xlu0 %1989
      %1993 = vset.pattern.permute.xlu0 0
      %1994 = vperm.xlu0 %1993, %v1944
      %v1995 = vpop.permute.xlu0 %1994
      %1998 = vset.pattern.permute.xlu0 0
      %1999 = vperm.xlu0 %1998, %v1945
      %v2000 = vpop.permute.xlu0 %1999
      %2003 = vset.pattern.permute.xlu0 0
      %2004 = vperm.xlu0 %2003, %v1946
      %v2005 = vpop.permute.xlu0 %2004
      %2008 = vset.pattern.permute.xlu0 0
      %2009 = vperm.xlu0 %2008, %v1947
      %v2010 = vpop.permute.xlu0 %2009
      %2013 = vset.pattern.permute.xlu0 0
      %2014 = vperm.xlu0 %2013, %v1948
      %v2015 = vpop.permute.xlu0 %2014
      %2018 = vset.pattern.permute.xlu0 0
      %2019 = vperm.xlu0 %2018, %v1949
      %v2020 = vpop.permute.xlu0 %2019
      %2023 = vset.pattern.permute.xlu0 0
      %2024 = vperm.xlu0 %2023, %v1950
      %v2025 = vpop.permute.xlu0 %2024
      %2028 = vset.pattern.permute.xlu0 0
      %2029 = vperm.xlu0 %2028, %v1951
      %v2030 = vpop.permute.xlu0 %2029
      %v2032 = vadd.f32 %v1904, %v1955
      %v2033 = vadd.f32 %v1905, %v1955
      %v2034 = vadd.f32 %v1906, %v1960
      %v2035 = vadd.f32 %v1907, %v1960
      %v2036 = vadd.f32 %v1908, %v1965
      %v2037 = vadd.f32 %v1909, %v1965
      %v2038 = vadd.f32 %v1910, %v1970
      %v2039 = vadd.f32 %v1911, %v1970
      %v2040 = vadd.f32 %v1912, %v1975
      %v2041 = vadd.f32 %v1913, %v1975
      %v2042 = vadd.f32 %v1914, %v1980
      %v2043 = vadd.f32 %v1915, %v1980
      %v2044 = vadd.f32 %v1916, %v1985
      %v2045 = vadd.f32 %v1917, %v1985
      %v2046 = vadd.f32 %v1918, %v1990
      %v2047 = vadd.f32 %v1919, %v1990
      %v2048 = vadd.f32 %v1920, %v1995
      %v2049 = vadd.f32 %v1921, %v1995
      %v2050 = vadd.f32 %v1922, %v2000
      %v2051 = vadd.f32 %v1923, %v2000
      %v2052 = vadd.f32 %v1924, %v2005
      %v2053 = vadd.f32 %v1925, %v2005
      %v2054 = vadd.f32 %v1926, %v2010
      %v2055 = vadd.f32 %v1927, %v2010
      %v2056 = vadd.f32 %v1928, %v2015
      %v2057 = vadd.f32 %v1929, %v2015
      %v2058 = vadd.f32 %v1930, %v2020
      %v2059 = vadd.f32 %v1931, %v2020
      %v2060 = vadd.f32 %v1932, %v2025
      %v2061 = vadd.f32 %v1933, %v2025
      %v2062 = vadd.f32 %v1934, %v2030
      %v2063 = vadd.f32 %v1935, %v2030
      %2064 = vst [vmem:[%s248] sm:$0xff] %v2032
      %2065 = vst.msk [vmem:[%s248 + $0x8] sm:$0xff] %vm1535, %v2033
      %2066 = vst [vmem:[%s248 + $0x10] sm:$0xff] %v2034
      %2067 = vst.msk [vmem:[%s248 + $0x18] sm:$0xff] %vm1535, %v2035
      %2068 = vst [vmem:[%s248 + $0x20] sm:$0xff] %v2036
      %2069 = vst.msk [vmem:[%s248 + $0x28] sm:$0xff] %vm1535, %v2037
      %2070 = vst [vmem:[%s248 + $0x30] sm:$0xff] %v2038
      %2071 = vst.msk [vmem:[%s248 + $0x38] sm:$0xff] %vm1535, %v2039
      %2072 = vst [vmem:[%s248 + $0x40] sm:$0xff] %v2040
      %2073 = vst.msk [vmem:[%s248 + $0x48] sm:$0xff] %vm1535, %v2041
      %2074 = vst [vmem:[%s248 + $0x50] sm:$0xff] %v2042
      %2075 = vst.msk [vmem:[%s248 + $0x58] sm:$0xff] %vm1535, %v2043
      %2076 = vst [vmem:[%s248 + $0x60] sm:$0xff] %v2044
      %2077 = vst.msk [vmem:[%s248 + $0x68] sm:$0xff] %vm1535, %v2045
      %2078 = vst [vmem:[%s248 + $0x70] sm:$0xff] %v2046
      %2079 = vst.msk [vmem:[%s248 + $0x78] sm:$0xff] %vm1535, %v2047
      %2080 = vst [vmem:[%s248 + $0x80] sm:$0xff] %v2048
      %2081 = vst.msk [vmem:[%s248 + $0x88] sm:$0xff] %vm1535, %v2049
      %2082 = vst [vmem:[%s248 + $0x90] sm:$0xff] %v2050
      %2083 = vst.msk [vmem:[%s248 + $0x98] sm:$0xff] %vm1535, %v2051
      %2084 = vst [vmem:[%s248 + $0xa0] sm:$0xff] %v2052
      %2085 = vst.msk [vmem:[%s248 + $0xa8] sm:$0xff] %vm1535, %v2053
      %2086 = vst [vmem:[%s248 + $0xb0] sm:$0xff] %v2054
      %2087 = vst.msk [vmem:[%s248 + $0xb8] sm:$0xff] %vm1535, %v2055
      %2088 = vst [vmem:[%s248 + $0xc0] sm:$0xff] %v2056
      %2089 = vst.msk [vmem:[%s248 + $0xc8] sm:$0xff] %vm1535, %v2057
      %2090 = vst [vmem:[%s248 + $0xd0] sm:$0xff] %v2058
      %2091 = vst.msk [vmem:[%s248 + $0xd8] sm:$0xff] %vm1535, %v2059
      %2092 = vst [vmem:[%s248 + $0xe0] sm:$0xff] %v2060
      %2093 = vst.msk [vmem:[%s248 + $0xe8] sm:$0xff] %vm1535, %v2061
      %2094 = vst [vmem:[%s248 + $0xf0] sm:$0xff] %v2062
      %2095 = vst.msk [vmem:[%s248 + $0xf8] sm:$0xff] %vm1535, %v2063
      %s2096 = smul.u32 16, %s15
      %p2097 = scmp.lt.s32.totalorder %s2096, 31
      %s2098 = scalar_select %p2097, %s2096, 31
      %s2099 = smul.addr %s2098, 2
      %s2100 = smul.addr %s2099, 8
      %s2101 = scalar_lea.vmem %s4, %s2100
      // Predicated region
      $region37: #{conv2d_bn.1} parent=35 // pred_check
        %p2102 = pneg %p132
      $region38: #{conv2d_bn.1} parent=35 // pred_check_branch
        %2104 = sbr.rel (%p2102) target = $region40
      $region39: #{conv2d_bn.1} parent=35 // pred_region
        %s2105 = smul.u32 16, %s15
      $region40: #{conv2d_bn.1} parent=35 // pred_fallthru
        _
    $region36: #{conv2d_bn.1} parent=5 // pred_fallthru
      _
    %p2106 = scmp.le.s32.totalorder 2, %s10
    // Predicated region
    $region41: #{conv2d_bn.1} parent=5 // pred_check
      %p2107 = pneg %p2106
    $region42: #{conv2d_bn.1} parent=5 // pred_check_branch
      %2109 = sbr.rel (%p2107) target = $region44
    $region43: #{conv2d_bn.1} parent=5 // pred_region
      %s2110 = ssub.s32 %s10, 2
      // Predicated region
      $region45: #{conv2d_bn.1} parent=43 // pred_check
        %p2111 = pneg %p138
      $region46: #{conv2d_bn.1} parent=43 // pred_check_branch
        %2113 = sbr.rel (%p2111) target = $region48
      $region47: #{conv2d_bn.1} parent=43 // pred_region
        %s2114 = smul.u32 16, %s16
        %p2115 = scmp.lt.s32.totalorder %s2114, 31
        %s2116 = scalar_select %p2115, %s2114, 31
        %s2117 = smul.addr %s2116, 2
        %s2118 = smul.addr %s2117, 8
        %s2119 = scalar_lea.vmem %s4, %s2118
      $region48: #{conv2d_bn.1} parent=43 // pred_fallthru
        _
    $region44: #{conv2d_bn.1} parent=5 // pred_fallthru
      _
  $region6: #{conv2d_bn.1} parent=0 // loop_footer
    %s14 = sadd.s32 1, %s10
  $region7: #{conv2d_bn.1} parent=0 // loop_footer_branch
    %9 = sbr.rel target = $region3
  $region8: #{conv2d_bn.1} parent=0 // loop_exit
    _

</llo_original>
